<compile_context>
chip_gen: v5e
topology: v5e:2x2
jax: 0.10.0
libtpu: 0.0.40
codegen_flags: <defaults>
</compile_context>

<pallas_src>
import functools

import jax
import jax.numpy as jnp
from jax import lax
from jax.experimental import pallas as pl
from jax.experimental.pallas import tpu as pltpu

HEADS = 8
LN_EPS = 1e-5
NEG_INF = -1e30
_HIGHEST = jax.lax.Precision.HIGHEST


def refining_kernel(a_ref, w_ref, b_ref, sbias_ref, o_ref, *, heads, block_rows):
    """One query-row tile of the RefiningBlock forward pass.

    a_ref     : (BN, C)      all tokens (resident; K/V need every row).
    w_ref     : (7C + M, C)  packed [wq|wk|wv|wav|wag|wqv|wqg|head_mask].
    b_ref     : (8, C)       packed [bq|bk|bv|b_val|b_gate|pad x3].
    sbias_ref : (TM, M)      additive cross-batch mask (0 / -1e30), row-tiled.
    o_ref     : (TM, C)      output rows of this tile.
    with M = heads * BN, TM = block_rows.
    """
    f32 = jnp.float32
    a_full = a_ref[...]                              # (BN, C)
    BN, C = a_full.shape
    d = C // heads
    M = heads * BN

    dot = functools.partial(jnp.dot, preferred_element_type=f32,
                            precision=_HIGHEST)

    # Static slices of the packed weight slab (sublane-aligned, free).
    wq = w_ref[0 * C:1 * C, :]
    wk = w_ref[1 * C:2 * C, :]
    wv = w_ref[2 * C:3 * C, :]
    wav = w_ref[3 * C:4 * C, :]
    wag = w_ref[4 * C:5 * C, :]
    wqv = w_ref[5 * C:6 * C, :]
    wqg = w_ref[6 * C:7 * C, :]
    head_maskf = w_ref[7 * C:7 * C + M, :]           # (M, C): row h*BN+m -> head h lanes

    b = b_ref[...]                                   # (8, C)
    bq, bk, bv = b[0:1, :], b[1:2, :], b[2:3, :]
    b_val, b_gate = b[3:4, :], b[4:5, :]

    # This tile's query rows.
    row0 = pl.multiple_of(pl.program_id(0) * block_rows, block_rows)
    a_rows = a_ref[pl.ds(row0, block_rows), :]       # (TM, C)

    # Projections.  Faithful quirk: key = v_layer(a), value = k_layer(a).
    # K/V cover all tokens; Q only this tile's rows.
    q = dot(a_rows, wq) + bq                         # (TM, C)
    k = dot(a_full, wv) + bv                         # (BN, C)
    v = dot(a_full, wk) + bk                         # (BN, C)

    # Head-expanded K/V: row h*BN + m is token m restricted to head h's lanes,
    # so multi-head attention is three plain 2-D MXU matmuls (no per-head loop,
    # no lane slicing at d = 4, no in-kernel reshapes/transposes).
    k_exp = jnp.tile(k, (heads, 1)) * head_maskf     # (M, C)
    v_exp = jnp.tile(v, (heads, 1)) * head_maskf     # (M, C)

    # Scores (lane-dense along M) + additive cross-batch mask, then softmax over
    # each head's BN-wide column group.  Masked entries underflow to exactly 0,
    # so a single (TM, M) temporary stays live.
    s = lax.dot_general(q, k_exp, (((1,), (1,)), ((), ())),
                        preferred_element_type=f32, precision=_HIGHEST)
    s = s * (1.0 / d ** 0.5) + sbias_ref[...]        # (TM, M)
    e = jnp.exp(s - jnp.max(s, axis=-1, keepdims=True))

    # Per-(row, head) softmax denominator, replicated over the head's d lanes,
    # via one MXU matmul against the 0/1 head mask.  Exact divide; the clamp
    # guards the degenerate all-underflow-head case.
    denom = jnp.maximum(dot(e, head_maskf), 1e-30)   # (TM, C)
    attn = dot(e, v_exp) / denom                     # (TM, C)

    # AoA: Linear([attn, q]) + GLU with pre-split weight blocks (no lane concat
    # or GLU lane slicing in-kernel).
    val = dot(attn, wav) + dot(q, wqv) + b_val
    gate = dot(attn, wag) + dot(q, wqg) + b_gate
    glu = val * jax.nn.sigmoid(gate)

    # Residual + LayerNorm (no affine params, eps = 1e-5).
    res = a_rows + glu
    mu = jnp.mean(res, axis=-1, keepdims=True)
    var = jnp.mean((res - mu) ** 2, axis=-1, keepdims=True)
    o_ref[...] = ((res - mu) * lax.rsqrt(var + LN_EPS)).astype(o_ref.dtype)
    # TODO(synk): at production BN, K/V are re-projected once per query tile;
    # hoist them into a separate pass / VMEM scratch (or flash-style key tiling)
    # if that projection ever shows up next to the (TM x 8*BN) score matmul.


def _pack_params(wq, bq, wk, bk, wv, bv, wp, bp, *, heads, B, N):
    """One-time parameter/constant packing (hoist out of the hot path)."""
    C = wq.shape[0]
    BN, M, d = B * N, heads * B * N, C // heads
    # AoA weight pre-split: [attn, q] concat rows, value/gate columns.
    wav, wag = wp[:C, :C], wp[:C, C:]
    wqv, wqg = wp[C:, :C], wp[C:, C:]
    # Head-selector mask rides along in the weight slab (same lane width C).
    head_mask = (jnp.arange(M)[:, None] // BN
                 == jnp.arange(C)[None, :] // d).astype(jnp.float32)
    wpack = jnp.concatenate([wq, wk, wv, wav, wag, wqv, wqg, head_mask], axis=0)
    bpack = jnp.concatenate([bq, bk, bv, bp[:, :C], bp[:, C:],
                             jnp.zeros((3, C), jnp.float32)], axis=0)     # (8, C)
    # Additive batch mask: query row r only attends to keys of its own batch
    # element (column j = h*BN + m corresponds to token m).
    q_batch = jnp.arange(BN)[:, None] // N
    k_batch = (jnp.arange(M)[None, :] % BN) // N
    sbias = jnp.where(q_batch == k_batch, 0.0, NEG_INF).astype(jnp.float32)
    return wpack, bpack, sbias


def refining_block(a, wq, bq, wk, bk, wv, bv, wp, bp, *, heads=HEADS,
                   block_rows=None, vmem_limit_bytes=None):
    B, N, C = a.shape
    assert C % heads == 0
    BN = B * N
    M = heads * BN

    if block_rows is None:
        # Single grid step at toy sizes (no per-step pipeline overhead);
        # 256-row query tiles at production sizes so the (TM, 8*BN) score slab
        # stays inside VMEM (v7x: 64 MiB) and the "parallel" grid can shard
        # across both v7x TensorCores.
        block_rows = BN if BN <= 256 else 256
    assert BN % block_rows == 0
    assert block_rows == BN or block_rows % 8 == 0

    # NOTE: in a real model, run _pack_params once per parameter set (or under
    # the same jit as the caller) so the packing is not re-issued per call.
    wpack, bpack, sbias = _pack_params(wq, bq, wk, bk, wv, bv, wp, bp,
                                       heads=heads, B=B, N=N)
    a2 = a.reshape(BN, C)                     # free row-major reshape (wrapper side)

    cp_kwargs = dict(dimension_semantics=("parallel",))
    if vmem_limit_bytes is not None:
        cp_kwargs["vmem_limit_bytes"] = vmem_limit_bytes

    out2 = pl.pallas_call(
        functools.partial(refining_kernel, heads=heads, block_rows=block_rows),
        out_shape=jax.ShapeDtypeStruct((BN, C), a.dtype),
        grid=(BN // block_rows,),
        in_specs=[
            pl.BlockSpec((BN, C), lambda i: (0, 0)),           # a: resident (K/V need all rows)
            pl.BlockSpec((7 * C + M, C), lambda i: (0, 0)),    # packed weights + head mask
            pl.BlockSpec((8, C), lambda i: (0, 0)),            # packed biases
            pl.BlockSpec((block_rows, M), lambda i: (i, 0)),   # batch-mask bias, row-tiled
        ],
        out_specs=pl.BlockSpec((block_rows, C), lambda i: (i, 0)),
        compiler_params=pltpu.CompilerParams(**cp_kwargs),
    )(a2, wpack, bpack, sbias)
    return out2.reshape(B, N, C)


def refining_block_ref(a, wq, bq, wk, bk, wv, bv, wp, bp, *, heads=HEADS):
    """Pure-JAX reference (same transposed-weight convention, f32 matmuls)."""
    B, N, C = a.shape
    d = C // heads
    dot = functools.partial(jnp.dot, precision=_HIGHEST)
    q = dot(a, wq) + bq
    k = dot(a, wv) + bv
    v = dot(a, wk) + bk
    qh = q.reshape(B, N, heads, d).transpose(0, 2, 1, 3)
    kh = k.reshape(B, N, heads, d).transpose(0, 2, 1, 3)
    vh = v.reshape(B, N, heads, d).transpose(0, 2, 1, 3)
    s = jnp.einsum("bhnd,bhmd->bhnm", qh, kh, precision=_HIGHEST) / (d ** 0.5)
    p = jax.nn.softmax(s, axis=-1)
    attn = jnp.einsum("bhnm,bhmd->bhnd", p, vh,
                      precision=_HIGHEST).transpose(0, 2, 1, 3).reshape(B, N, C)
    pp = dot(jnp.concatenate([attn, q], axis=-1), wp) + bp
    glu = pp[..., :C] * jax.nn.sigmoid(pp[..., C:])
    res = a + glu
    mu = jnp.mean(res, axis=-1, keepdims=True)
    var = jnp.mean((res - mu) ** 2, axis=-1, keepdims=True)
    return (res - mu) * lax.rsqrt(var + LN_EPS)


if __name__ == "__main__":
    B, N, C = 2, 8, 32          # inplanes = 32, divisible by heads = 8
    key = jax.random.PRNGKey(0)
    ks = jax.random.split(key, 9)

    a = jax.random.normal(ks[0], (B, N, C), dtype=jnp.float32)
    # Deterministic synthetic parameters (already in (in, out) layout; biases (1, out)).
    wq = 0.1 * jax.random.normal(ks[1], (C, C), dtype=jnp.float32)
    bq = 0.1 * jax.random.normal(ks[2], (1, C), dtype=jnp.float32)
    wk = 0.1 * jax.random.normal(ks[3], (C, C), dtype=jnp.float32)
    bk = 0.1 * jax.random.normal(ks[4], (1, C), dtype=jnp.float32)
    wv = 0.1 * jax.random.normal(ks[5], (C, C), dtype=jnp.float32)
    bv = 0.1 * jax.random.normal(ks[6], (1, C), dtype=jnp.float32)
    wp = 0.1 * jax.random.normal(ks[7], (2 * C, 2 * C), dtype=jnp.float32)
    bp = 0.1 * jax.random.normal(ks[8], (1, 2 * C), dtype=jnp.float32)

    ref = refining_block_ref(a, wq, bq, wk, bk, wv, bv, wp, bp)

    # Default path: single grid step (no per-step overhead at toy BN = 16).
    out = jax.jit(refining_block)(a, wq, bq, wk, bk, wv, bv, wp, bp)
    jax.block_until_ready(out)
    assert out.shape == (B, N, C)
    assert jnp.allclose(out, ref, atol=5e-4, rtol=5e-4), "mismatch (single-step path)"

    # Row-tiled path (the v7x / large-BN scaling path), exercised here with a
    # tiny 8-row tile just to validate the grid end-to-end.
    out_tiled = jax.jit(functools.partial(refining_block, block_rows=8))(
        a, wq, bq, wk, bk, wv, bv, wp, bp)
    jax.block_until_ready(out_tiled)
    assert jnp.allclose(out_tiled, ref, atol=5e-4, rtol=5e-4), "mismatch (row-tiled path)"

    print("KERNEL_OK")
</pallas_src>

<mosaic_0001>
module attributes {stable_mosaic.version = 11 : i64} {
  func.func @refining_kernel(%arg0: i32, %arg1: memref<16x32xf32, #tpu.memory_space<vmem>>, %arg2: memref<352x32xf32, #tpu.memory_space<vmem>>, %arg3: memref<8x32xf32, #tpu.memory_space<vmem>>, %arg4: memref<16x128xf32, #tpu.memory_space<vmem>>, %arg5: memref<16x32xf32, #tpu.memory_space<vmem>>) attributes {dimension_semantics = [#tpu.dimension_semantics<parallel>], iteration_bounds = array<i64: 1>, scalar_prefetch = 0 : i64, scratch_operands = 0 : i64, tpu.core_type = #tpu.core_type<tc>, window_params = [{pipeline_mode = #tpu.pipeline_mode<synchronous>, transform_indices = @transform_0, window_bounds = array<i64: 16, 32>}, {pipeline_mode = #tpu.pipeline_mode<synchronous>, transform_indices = @transform_1, window_bounds = array<i64: 352, 32>}, {pipeline_mode = #tpu.pipeline_mode<synchronous>, transform_indices = @transform_2, window_bounds = array<i64: 8, 32>}, {transform_indices = @transform_3, window_bounds = array<i64: 16, 128>}, {transform_indices = @transform_4, window_bounds = array<i64: 16, 32>}]} {
    %c0 = arith.constant 0 : index
    %c0_0 = arith.constant 0 : index
    %0 = vector.load %arg1[%c0, %c0_0] : memref<16x32xf32, #tpu.memory_space<vmem>>, vector<16x32xf32>
    %c0_1 = arith.constant 0 : index
    %c0_2 = arith.constant 0 : index
    %1 = vector.load %arg2[%c0_1, %c0_2] : memref<352x32xf32, #tpu.memory_space<vmem>>, vector<32x32xf32>
    %c32 = arith.constant 32 : index
    %c0_3 = arith.constant 0 : index
    %2 = vector.load %arg2[%c32, %c0_3] : memref<352x32xf32, #tpu.memory_space<vmem>>, vector<32x32xf32>
    %c64 = arith.constant 64 : index
    %c0_4 = arith.constant 0 : index
    %3 = vector.load %arg2[%c64, %c0_4] : memref<352x32xf32, #tpu.memory_space<vmem>>, vector<32x32xf32>
    %c96 = arith.constant 96 : index
    %c0_5 = arith.constant 0 : index
    %4 = vector.load %arg2[%c96, %c0_5] : memref<352x32xf32, #tpu.memory_space<vmem>>, vector<32x32xf32>
    %c128 = arith.constant 128 : index
    %c0_6 = arith.constant 0 : index
    %5 = vector.load %arg2[%c128, %c0_6] : memref<352x32xf32, #tpu.memory_space<vmem>>, vector<32x32xf32>
    %c160 = arith.constant 160 : index
    %c0_7 = arith.constant 0 : index
    %6 = vector.load %arg2[%c160, %c0_7] : memref<352x32xf32, #tpu.memory_space<vmem>>, vector<32x32xf32>
    %c192 = arith.constant 192 : index
    %c0_8 = arith.constant 0 : index
    %7 = vector.load %arg2[%c192, %c0_8] : memref<352x32xf32, #tpu.memory_space<vmem>>, vector<32x32xf32>
    %c224 = arith.constant 224 : index
    %c0_9 = arith.constant 0 : index
    %8 = vector.load %arg2[%c224, %c0_9] : memref<352x32xf32, #tpu.memory_space<vmem>>, vector<128x32xf32>
    %c0_10 = arith.constant 0 : index
    %c0_11 = arith.constant 0 : index
    %9 = vector.load %arg3[%c0_10, %c0_11] : memref<8x32xf32, #tpu.memory_space<vmem>>, vector<8x32xf32>
    %10 = vector.extract_strided_slice %9 {offsets = [0, 0], sizes = [1, 32], strides = [1, 1]} : vector<8x32xf32> to vector<1x32xf32>
    %11 = vector.extract_strided_slice %9 {offsets = [1, 0], sizes = [1, 32], strides = [1, 1]} : vector<8x32xf32> to vector<1x32xf32>
    %12 = vector.extract_strided_slice %9 {offsets = [2, 0], sizes = [1, 32], strides = [1, 1]} : vector<8x32xf32> to vector<1x32xf32>
    %13 = vector.extract_strided_slice %9 {offsets = [3, 0], sizes = [1, 32], strides = [1, 1]} : vector<8x32xf32> to vector<1x32xf32>
    %14 = vector.extract_strided_slice %9 {offsets = [4, 0], sizes = [1, 32], strides = [1, 1]} : vector<8x32xf32> to vector<1x32xf32>
    %c16_i32 = arith.constant 16 : i32
    %15 = arith.muli %arg0, %c16_i32 : i32
    %16 = tpu.assume_multiple %15, 16 : i32
    %17 = arith.index_cast %16 : i32 to index
    %c0_12 = arith.constant 0 : index
    %18 = vector.load %arg1[%17, %c0_12] : memref<16x32xf32, #tpu.memory_space<vmem>>, vector<16x32xf32>
    %cst = arith.constant dense<0.000000e+00> : vector<16x32xf32>
    %19 = tpu.matmul %18, %1, %cst {dimension_numbers = #tpu.dot_dimension_numbers<[1], [0], [0], [1], [0, 0, 1, 1], [], []>, precision = #tpu.contract_precision<fp32>} : vector<16x32xf32>, vector<32x32xf32>, vector<16x32xf32> -> vector<16x32xf32>
    %20 = vector.broadcast %10 : vector<1x32xf32> to vector<16x32xf32>
    %21 = arith.addf %19, %20 : vector<16x32xf32>
    %cst_13 = arith.constant dense<0.000000e+00> : vector<16x32xf32>
    %22 = tpu.matmul %0, %3, %cst_13 {dimension_numbers = #tpu.dot_dimension_numbers<[1], [0], [0], [1], [0, 0, 1, 1], [], []>, precision = #tpu.contract_precision<fp32>} : vector<16x32xf32>, vector<32x32xf32>, vector<16x32xf32> -> vector<16x32xf32>
    %23 = vector.broadcast %12 : vector<1x32xf32> to vector<16x32xf32>
    %24 = arith.addf %22, %23 : vector<16x32xf32>
    %cst_14 = arith.constant dense<0.000000e+00> : vector<16x32xf32>
    %25 = tpu.matmul %0, %2, %cst_14 {dimension_numbers = #tpu.dot_dimension_numbers<[1], [0], [0], [1], [0, 0, 1, 1], [], []>, precision = #tpu.contract_precision<fp32>} : vector<16x32xf32>, vector<32x32xf32>, vector<16x32xf32> -> vector<16x32xf32>
    %26 = vector.broadcast %11 : vector<1x32xf32> to vector<16x32xf32>
    %27 = arith.addf %25, %26 : vector<16x32xf32>
    %28 = tpu.concatenate %24, %24, %24, %24, %24, %24, %24, %24 in 0 : vector<16x32xf32>, vector<16x32xf32>, vector<16x32xf32>, vector<16x32xf32>, vector<16x32xf32>, vector<16x32xf32>, vector<16x32xf32>, vector<16x32xf32> -> vector<128x32xf32>
    %29 = arith.mulf %28, %8 : vector<128x32xf32>
    %30 = tpu.concatenate %27, %27, %27, %27, %27, %27, %27, %27 in 0 : vector<16x32xf32>, vector<16x32xf32>, vector<16x32xf32>, vector<16x32xf32>, vector<16x32xf32>, vector<16x32xf32>, vector<16x32xf32>, vector<16x32xf32> -> vector<128x32xf32>
    %31 = arith.mulf %30, %8 : vector<128x32xf32>
    %cst_15 = arith.constant dense<0.000000e+00> : vector<16x128xf32>
    %32 = tpu.matmul %21, %29, %cst_15 {dimension_numbers = #tpu.dot_dimension_numbers<[1], [1], [0], [0], [0, 0, 1, 0], [], []>, precision = #tpu.contract_precision<fp32>} : vector<16x32xf32>, vector<128x32xf32>, vector<16x128xf32> -> vector<16x128xf32>
    %cst_16 = arith.constant 5.000000e-01 : f32
    %33 = vector.broadcast %cst_16 : f32 to vector<16x128xf32>
    %34 = arith.mulf %32, %33 : vector<16x128xf32>
    %c0_17 = arith.constant 0 : index
    %c0_18 = arith.constant 0 : index
    %35 = vector.load %arg4[%c0_17, %c0_18] : memref<16x128xf32, #tpu.memory_space<vmem>>, vector<16x128xf32>
    %36 = arith.addf %34, %35 : vector<16x128xf32>
    %cst_19 = arith.constant dense<0xFF800000> : vector<16xf32>
    %37 = vector.multi_reduction <maximumf>, %36, %cst_19 [1] : vector<16x128xf32> to vector<16xf32>
    %38 = vector.shape_cast %37 : vector<16xf32> to vector<16x1xf32>
    %39 = vector.broadcast %38 : vector<16x1xf32> to vector<16x128xf32>
    %40 = arith.subf %36, %39 : vector<16x128xf32>
    %41 = math.exp %40 : vector<16x128xf32>
    %cst_20 = arith.constant dense<0.000000e+00> : vector<16x32xf32>
    %42 = tpu.matmul %41, %8, %cst_20 {dimension_numbers = #tpu.dot_dimension_numbers<[1], [0], [0], [1], [0, 0, 1, 1], [], []>, precision = #tpu.contract_precision<fp32>} : vector<16x128xf32>, vector<128x32xf32>, vector<16x32xf32> -> vector<16x32xf32>
    %cst_21 = arith.constant 1.000000e-30 : f32
    %43 = vector.broadcast %cst_21 : f32 to vector<16x32xf32>
    %44 = arith.maximumf %42, %43 : vector<16x32xf32>
    %cst_22 = arith.constant dense<0.000000e+00> : vector<16x32xf32>
    %45 = tpu.matmul %41, %31, %cst_22 {dimension_numbers = #tpu.dot_dimension_numbers<[1], [0], [0], [1], [0, 0, 1, 1], [], []>, precision = #tpu.contract_precision<fp32>} : vector<16x128xf32>, vector<128x32xf32>, vector<16x32xf32> -> vector<16x32xf32>
    %46 = arith.divf %45, %44 : vector<16x32xf32>
    %cst_23 = arith.constant dense<0.000000e+00> : vector<16x32xf32>
    %47 = tpu.matmul %46, %4, %cst_23 {dimension_numbers = #tpu.dot_dimension_numbers<[1], [0], [0], [1], [0, 0, 1, 1], [], []>, precision = #tpu.contract_precision<fp32>} : vector<16x32xf32>, vector<32x32xf32>, vector<16x32xf32> -> vector<16x32xf32>
    %cst_24 = arith.constant dense<0.000000e+00> : vector<16x32xf32>
    %48 = tpu.matmul %21, %6, %cst_24 {dimension_numbers = #tpu.dot_dimension_numbers<[1], [0], [0], [1], [0, 0, 1, 1], [], []>, precision = #tpu.contract_precision<fp32>} : vector<16x32xf32>, vector<32x32xf32>, vector<16x32xf32> -> vector<16x32xf32>
    %49 = arith.addf %47, %48 : vector<16x32xf32>
    %50 = vector.broadcast %13 : vector<1x32xf32> to vector<16x32xf32>
    %51 = arith.addf %49, %50 : vector<16x32xf32>
    %cst_25 = arith.constant dense<0.000000e+00> : vector<16x32xf32>
    %52 = tpu.matmul %46, %5, %cst_25 {dimension_numbers = #tpu.dot_dimension_numbers<[1], [0], [0], [1], [0, 0, 1, 1], [], []>, precision = #tpu.contract_precision<fp32>} : vector<16x32xf32>, vector<32x32xf32>, vector<16x32xf32> -> vector<16x32xf32>
    %cst_26 = arith.constant dense<0.000000e+00> : vector<16x32xf32>
    %53 = tpu.matmul %21, %7, %cst_26 {dimension_numbers = #tpu.dot_dimension_numbers<[1], [0], [0], [1], [0, 0, 1, 1], [], []>, precision = #tpu.contract_precision<fp32>} : vector<16x32xf32>, vector<32x32xf32>, vector<16x32xf32> -> vector<16x32xf32>
    %54 = arith.addf %52, %53 : vector<16x32xf32>
    %55 = vector.broadcast %14 : vector<1x32xf32> to vector<16x32xf32>
    %56 = arith.addf %54, %55 : vector<16x32xf32>
    %57 = arith.negf %56 : vector<16x32xf32>
    %58 = math.exp %57 : vector<16x32xf32>
    %cst_27 = arith.constant 1.000000e+00 : f32
    %59 = vector.broadcast %cst_27 : f32 to vector<16x32xf32>
    %60 = arith.addf %59, %58 : vector<16x32xf32>
    %61 = arith.divf %59, %60 : vector<16x32xf32>
    %62 = arith.mulf %51, %61 : vector<16x32xf32>
    %63 = arith.addf %18, %62 : vector<16x32xf32>
    %cst_28 = arith.constant dense<0.000000e+00> : vector<16xf32>
    %64 = vector.multi_reduction <add>, %63, %cst_28 [1] : vector<16x32xf32> to vector<16xf32>
    %65 = vector.shape_cast %64 : vector<16xf32> to vector<16x1xf32>
    %cst_29 = arith.constant 3.200000e+01 : f32
    %66 = vector.broadcast %cst_29 : f32 to vector<16x1xf32>
    %67 = arith.divf %65, %66 : vector<16x1xf32>
    %68 = vector.broadcast %67 : vector<16x1xf32> to vector<16x32xf32>
    %69 = arith.subf %63, %68 : vector<16x32xf32>
    %70 = arith.mulf %69, %69 : vector<16x32xf32>
    %cst_30 = arith.constant dense<0.000000e+00> : vector<16xf32>
    %71 = vector.multi_reduction <add>, %70, %cst_30 [1] : vector<16x32xf32> to vector<16xf32>
    %72 = vector.shape_cast %71 : vector<16xf32> to vector<16x1xf32>
    %cst_31 = arith.constant 3.200000e+01 : f32
    %73 = vector.broadcast %cst_31 : f32 to vector<16x1xf32>
    %74 = arith.divf %72, %73 : vector<16x1xf32>
    %75 = vector.broadcast %67 : vector<16x1xf32> to vector<16x32xf32>
    %76 = arith.subf %63, %75 : vector<16x32xf32>
    %cst_32 = arith.constant 9.99999974E-6 : f32
    %77 = vector.broadcast %cst_32 : f32 to vector<16x1xf32>
    %78 = arith.addf %74, %77 : vector<16x1xf32>
    %79 = math.rsqrt %78 : vector<16x1xf32>
    %80 = vector.broadcast %79 : vector<16x1xf32> to vector<16x32xf32>
    %81 = arith.mulf %76, %80 : vector<16x32xf32>
    %c0_33 = arith.constant 0 : index
    %c0_34 = arith.constant 0 : index
    %82 = vector.load %arg5[%c0_33, %c0_34] : memref<16x32xf32, #tpu.memory_space<vmem>>, vector<16x32xf32>
    tpu.vector_store %arg5[%c0_33, %c0_34], %81 {strides = array<i32>} : memref<16x32xf32, #tpu.memory_space<vmem>>, vector<16x32xf32>,
    return
  }
  func.func @transform_0(%arg0: i32) -> (i32, i32) {
    %c0_i32 = arith.constant 0 : i32
    %c0_i32_0 = arith.constant 0 : i32
    %c0_i32_1 = arith.constant 0 : i32
    return %c0_i32, %c0_i32_0 : i32, i32
  }
  func.func @transform_1(%arg0: i32) -> (i32, i32) {
    %c0_i32 = arith.constant 0 : i32
    %c0_i32_0 = arith.constant 0 : i32
    %c0_i32_1 = arith.constant 0 : i32
    return %c0_i32, %c0_i32_0 : i32, i32
  }
  func.func @transform_2(%arg0: i32) -> (i32, i32) {
    %c0_i32 = arith.constant 0 : i32
    %c0_i32_0 = arith.constant 0 : i32
    %c0_i32_1 = arith.constant 0 : i32
    return %c0_i32, %c0_i32_0 : i32, i32
  }
  func.func @transform_3(%arg0: i32) -> (i32, i32) {
    %c0_i32 = arith.constant 0 : i32
    %c0_i32_0 = arith.constant 0 : i32
    return %arg0, %c0_i32 : i32, i32
  }
  func.func @transform_4(%arg0: i32) -> (i32, i32) {
    %c0_i32 = arith.constant 0 : i32
    %c0_i32_0 = arith.constant 0 : i32
    return %arg0, %c0_i32 : i32, i32
  }
}

</mosaic_0001>

<llo_original>
// kernel: refining_block.1
$region0: #{refining_block.1}
  #allocation0 [shape = 'u32[]', space=smem, size = 0x4, offset = 0x4, fixed_abs, tag = 'smem constant byte address 0x4 - core index']
  #allocation1 [shape = 'u32[72,128]{1,0:T(1,128)}', space=vmem, size = 0x9000, scoped, tag = 'internal scratch']
  %s0 = inlined_call_operand.vmem [shape: f32[16,32], index: 0, kind: input, shape index: {}]
  %s1 = inlined_call_operand.vmem [shape: f32[352,32], index: 1, kind: input, shape index: {}]
  %s2 = inlined_call_operand.vmem [shape: f32[8,32], index: 2, kind: input, shape index: {}]
  %s3 = inlined_call_operand.vmem [shape: f32[16,128], index: 3, kind: input, shape index: {}]
  %s4 = inlined_call_operand.hbm [shape: f32[16,32], index: 4, kind: output, shape index: {}]
  %s5 = sld [smem:[#allocation0]]
  $region26: #{refining_block.1} parent=0
    _
  %s7 = ssub.s32 1, %s5
  %s8 = scalar_select 0, %s7, %s5
  $region1: #{refining_block.1} parent=0
    #allocation2 [shape = 'u8[8192]{0}', space=vmem, size = 0x2000, scoped, tag = 'output window, operand 0, single buffered']
    #allocation3 [shape = 's32[1]{0}', space=sflag, size = 0x4, scoped, tag = 'scoped memory for refining_block.1']
    %9 = vsyncpa [#allocation3], 0
    // Predicated region
    $region2: #{refining_block.1} parent=1 // pred_check
      _
    $region3: #{refining_block.1} parent=1 // pred_check_branch
      %11 = sbr.rel (0) target = $region5
    $region4: #{refining_block.1} parent=1 // pred_region
      _
    $region5: #{refining_block.1} parent=1 // pred_fallthru
      _
    // Predicated region
    $region6: #{refining_block.1} parent=1 // pred_check
      _
    $region7: #{refining_block.1} parent=1 // pred_check_branch
      %13 = sbr.rel (0) target = $region9
    $region8: #{refining_block.1} parent=1 // pred_region
      _
    $region9: #{refining_block.1} parent=1 // pred_fallthru
      _
    // Predicated region
    $region10: #{refining_block.1} parent=1 // pred_check
      _
    $region11: #{refining_block.1} parent=1 // pred_check_branch
      %15 = sbr.rel (0) target = $region13
    $region12: #{refining_block.1} parent=1 // pred_region
      _
    $region13: #{refining_block.1} parent=1 // pred_fallthru
      _
    // Predicated region
    $region14: #{refining_block.1} parent=1 // pred_check
      _
    $region15: #{refining_block.1} parent=1 // pred_check_branch
      %17 = sbr.rel (0) target = $region17
    $region16: #{refining_block.1} parent=1 // pred_region
      _
    $region17: #{refining_block.1} parent=1 // pred_fallthru
      _
    %v18 = vld [vmem:[%s0] sm:$0xff]
    %v19 = vld [vmem:[%s0 + $0x8] sm:$0xff]
    %v20 = vld [vmem:[%s1] sm:$0xff]
    %v21 = vld [vmem:[%s1 + $0x8] sm:$0xff]
    %v22 = vld [vmem:[%s1 + $0x10] sm:$0xff]
    %v23 = vld [vmem:[%s1 + $0x18] sm:$0xff]
    %v24 = vld [vmem:[%s1 + $0x20] sm:$0xff]
    %v25 = vld [vmem:[%s1 + $0x28] sm:$0xff]
    %v26 = vld [vmem:[%s1 + $0x30] sm:$0xff]
    %v27 = vld [vmem:[%s1 + $0x38] sm:$0xff]
    %v28 = vld [vmem:[%s1 + $0x40] sm:$0xff]
    %v29 = vld [vmem:[%s1 + $0x48] sm:$0xff]
    %v30 = vld [vmem:[%s1 + $0x50] sm:$0xff]
    %v31 = vld [vmem:[%s1 + $0x58] sm:$0xff]
    %v32 = vld [vmem:[%s1 + $0x60] sm:$0xff]
    %v33 = vld [vmem:[%s1 + $0x68] sm:$0xff]
    %v34 = vld [vmem:[%s1 + $0x70] sm:$0xff]
    %v35 = vld [vmem:[%s1 + $0x78] sm:$0xff]
    %v36 = vld [vmem:[%s1 + $0x80] sm:$0xff]
    %v37 = vld [vmem:[%s1 + $0x88] sm:$0xff]
    %v38 = vld [vmem:[%s1 + $0x90] sm:$0xff]
    %v39 = vld [vmem:[%s1 + $0x98] sm:$0xff]
    %v40 = vld [vmem:[%s1 + $0xa0] sm:$0xff]
    %v41 = vld [vmem:[%s1 + $0xa8] sm:$0xff]
    %v42 = vld [vmem:[%s1 + $0xb0] sm:$0xff]
    %v43 = vld [vmem:[%s1 + $0xb8] sm:$0xff]
    %v44 = vld [vmem:[%s1 + $0xc0] sm:$0xff]
    %v45 = vld [vmem:[%s1 + $0xc8] sm:$0xff]
    %v46 = vld [vmem:[%s1 + $0xd0] sm:$0xff]
    %v47 = vld [vmem:[%s1 + $0xd8] sm:$0xff]
    %v48 = vld [vmem:[%s1 + $0xe0] sm:$0xff]
    %v49 = vld [vmem:[%s1 + $0xe8] sm:$0xff]
    %v50 = vld [vmem:[%s1 + $0xf0] sm:$0xff]
    %v51 = vld [vmem:[%s1 + $0xf8] sm:$0xff]
    %v52 = vld [vmem:[%s1 + $0x100] sm:$0xff]
    %v53 = vld [vmem:[%s1 + $0x108] sm:$0xff]
    %v54 = vld [vmem:[%s1 + $0x110] sm:$0xff]
    %v55 = vld [vmem:[%s1 + $0x118] sm:$0xff]
    %v56 = vld [vmem:[%s1 + $0x120] sm:$0xff]
    %v57 = vld [vmem:[%s1 + $0x128] sm:$0xff]
    %v58 = vld [vmem:[%s1 + $0x130] sm:$0xff]
    %v59 = vld [vmem:[%s1 + $0x138] sm:$0xff]
    %v60 = vld [vmem:[%s1 + $0x140] sm:$0xff]
    %v61 = vld [vmem:[%s1 + $0x148] sm:$0xff]
    %v62 = vld [vmem:[%s1 + $0x150] sm:$0xff]
    %v63 = vld [vmem:[%s1 + $0x158] sm:$0xff]
    %v64 = vld [vmem:[%s2] sm:$0xff]
    %s65 = smul.u32 0, 16
    %s66 = scalar_lea.vmem %s0, %s65
    %v67 = vld [vmem:[%s66] sm:$0xff]
    %v68 = vld [vmem:[%s66 + $0x8] sm:$0xff]
    %v69 = vperm.slane %v64, 0
    %vm70 = vcmask 261120
    %v72 = vsel %vm70, %v67, 0
    %v75 = vsel %vm70, %v68, 0
    %77 = vmatpush.msra.mxu0 0.0
    %78 = vmatpush.msra.mxu0 0.0
    %79 = vmatpush.msra.mxu0 0.0
    %80 = vmatpush.msra.mxu0 0.0
    %81 = vmatpush.msra.mxu0 0.0
    %82 = vmatpush.msra.mxu0 0.0
    %83 = vmatpush.msra.mxu0 0.0
    %84 = vmatpush.msra.mxu0 0.0
    %85 = vmatpush.msra.mxu0 0.0
    %86 = vmatpush.msra.mxu0 0.0
    %87 = vmatpush.msra.mxu0 0.0
    %88 = vmatpush.msra.mxu0 0.0
    %v89 = vand.u32 %v23, 4294901760
    %90 = vmatpush.msra.mxu0 %v89
    %v91 = vand.u32 %v22, 4294901760
    %92 = vmatpush.msra.mxu0 %v91
    %v93 = vand.u32 %v21, 4294901760
    %94 = vmatpush.msra.mxu0 %v93
    %v95 = vand.u32 %v20, 4294901760
    %96 = vmatpush.msra.mxu0 %v95
    %v97 = vand.u32 %v72, 4294901760
    %v98 = vsub.f32 %v72, %v97
    %v99 = vand.u32 %v98, 4294901760
    %v100 = vsub.f32 %v98, %v99
    %v101 = vand.u32 %v100, 4294901760
    %102 = vmatmul.f32.gmra.mxu0 %v101
    %v103 = vpop.f32.mrf.mxu0
    %v104 = vadd.f32 %v69, %v103
    %v105 = vand.u32 %v75, 4294901760
    %v106 = vsub.f32 %v75, %v105
    %v107 = vand.u32 %v106, 4294901760
    %v108 = vsub.f32 %v106, %v107
    %v109 = vand.u32 %v108, 4294901760
    %110 = vmatmul.f32.gmra.mxu0 %v109
    %v111 = vpop.f32.mrf.mxu0
    %v112 = vadd.f32 %v69, %v111
    %113 = vdwg.mxu0
    %114 = vmatpush.msra.mxu0 0.0
    %115 = vmatpush.msra.mxu0 0.0
    %116 = vmatpush.msra.mxu0 0.0
    %117 = vmatpush.msra.mxu0 0.0
    %118 = vmatpush.msra.mxu0 0.0
    %119 = vmatpush.msra.mxu0 0.0
    %120 = vmatpush.msra.mxu0 0.0
    %121 = vmatpush.msra.mxu0 0.0
    %122 = vmatpush.msra.mxu0 0.0
    %123 = vmatpush.msra.mxu0 0.0
    %124 = vmatpush.msra.mxu0 0.0
    %125 = vmatpush.msra.mxu0 0.0
    %v126 = vand.u32 %v23, 4294901760
    %v127 = vsub.f32 %v23, %v126
    %v128 = vand.u32 %v127, 4294901760
    %v129 = vsub.f32 %v127, %v128
    %v130 = vand.u32 %v129, 4294901760
    %131 = vmatpush.msra.mxu0 %v130
    %v132 = vand.u32 %v22, 4294901760
    %v133 = vsub.f32 %v22, %v132
    %v134 = vand.u32 %v133, 4294901760
    %v135 = vsub.f32 %v133, %v134
    %v136 = vand.u32 %v135, 4294901760
    %137 = vmatpush.msra.mxu0 %v136
    %v138 = vand.u32 %v21, 4294901760
    %v139 = vsub.f32 %v21, %v138
    %v140 = vand.u32 %v139, 4294901760
    %v141 = vsub.f32 %v139, %v140
    %v142 = vand.u32 %v141, 4294901760
    %143 = vmatpush.msra.mxu0 %v142
    %v144 = vand.u32 %v20, 4294901760
    %v145 = vsub.f32 %v20, %v144
    %v146 = vand.u32 %v145, 4294901760
    %v147 = vsub.f32 %v145, %v146
    %v148 = vand.u32 %v147, 4294901760
    %149 = vmatpush.msra.mxu0 %v148
    %v150 = vand.u32 %v72, 4294901760
    %151 = vmatmul.f32.gmra.mxu0 %v150
    %v152 = vpop.f32.mrf.mxu0
    %v153 = vadd.f32 %v104, %v152
    %v154 = vand.u32 %v75, 4294901760
    %155 = vmatmul.f32.gmra.mxu0 %v154
    %v156 = vpop.f32.mrf.mxu0
    %v157 = vadd.f32 %v112, %v156
    %158 = vdwg.mxu0
    %159 = vmatpush.msra.mxu0 0.0
    %160 = vmatpush.msra.mxu0 0.0
    %161 = vmatpush.msra.mxu0 0.0
    %162 = vmatpush.msra.mxu0 0.0
    %163 = vmatpush.msra.mxu0 0.0
    %164 = vmatpush.msra.mxu0 0.0
    %165 = vmatpush.msra.mxu0 0.0
    %166 = vmatpush.msra.mxu0 0.0
    %167 = vmatpush.msra.mxu0 0.0
    %168 = vmatpush.msra.mxu0 0.0
    %169 = vmatpush.msra.mxu0 0.0
    %170 = vmatpush.msra.mxu0 0.0
    %v171 = vand.u32 %v23, 4294901760
    %v172 = vsub.f32 %v23, %v171
    %173 = vmatpush.msra.mxu0 %v172
    %v174 = vand.u32 %v22, 4294901760
    %v175 = vsub.f32 %v22, %v174
    %176 = vmatpush.msra.mxu0 %v175
    %v177 = vand.u32 %v21, 4294901760
    %v178 = vsub.f32 %v21, %v177
    %179 = vmatpush.msra.mxu0 %v178
    %v180 = vand.u32 %v20, 4294901760
    %v181 = vsub.f32 %v20, %v180
    %182 = vmatpush.msra.mxu0 %v181
    %v183 = vand.u32 %v72, 4294901760
    %v184 = vsub.f32 %v72, %v183
    %185 = vmatmul.f32.gmra.mxu0 %v184
    %v186 = vpop.f32.mrf.mxu0
    %v187 = vadd.f32 %v153, %v186
    %v188 = vand.u32 %v75, 4294901760
    %v189 = vsub.f32 %v75, %v188
    %190 = vmatmul.f32.gmra.mxu0 %v189
    %v191 = vpop.f32.mrf.mxu0
    %v192 = vadd.f32 %v157, %v191
    %193 = vdwg.mxu0
    %194 = vmatpush.msra.mxu0 0.0
    %195 = vmatpush.msra.mxu0 0.0
    %196 = vmatpush.msra.mxu0 0.0
    %197 = vmatpush.msra.mxu0 0.0
    %198 = vmatpush.msra.mxu0 0.0
    %199 = vmatpush.msra.mxu0 0.0
    %200 = vmatpush.msra.mxu0 0.0
    %201 = vmatpush.msra.mxu0 0.0
    %202 = vmatpush.msra.mxu0 0.0
    %203 = vmatpush.msra.mxu0 0.0
    %204 = vmatpush.msra.mxu0 0.0
    %205 = vmatpush.msra.mxu0 0.0
    %v206 = vand.u32 %v23, 4294901760
    %207 = vmatpush.msra.mxu0 %v206
    %v208 = vand.u32 %v22, 4294901760
    %209 = vmatpush.msra.mxu0 %v208
    %v210 = vand.u32 %v21, 4294901760
    %211 = vmatpush.msra.mxu0 %v210
    %v212 = vand.u32 %v20, 4294901760
    %213 = vmatpush.msra.mxu0 %v212
    %v214 = vand.u32 %v72, 4294901760
    %v215 = vsub.f32 %v72, %v214
    %v216 = vand.u32 %v215, 4294901760
    %217 = vmatmul.f32.gmra.mxu0 %v216
    %v218 = vpop.f32.mrf.mxu0
    %v219 = vadd.f32 %v187, %v218
    %v220 = vand.u32 %v75, 4294901760
    %v221 = vsub.f32 %v75, %v220
    %v222 = vand.u32 %v221, 4294901760
    %223 = vmatmul.f32.gmra.mxu0 %v222
    %v224 = vpop.f32.mrf.mxu0
    %v225 = vadd.f32 %v192, %v224
    %226 = vdwg.mxu0
    %227 = vmatpush.msra.mxu0 0.0
    %228 = vmatpush.msra.mxu0 0.0
    %229 = vmatpush.msra.mxu0 0.0
    %230 = vmatpush.msra.mxu0 0.0
    %231 = vmatpush.msra.mxu0 0.0
    %232 = vmatpush.msra.mxu0 0.0
    %233 = vmatpush.msra.mxu0 0.0
    %234 = vmatpush.msra.mxu0 0.0
    %235 = vmatpush.msra.mxu0 0.0
    %236 = vmatpush.msra.mxu0 0.0
    %237 = vmatpush.msra.mxu0 0.0
    %238 = vmatpush.msra.mxu0 0.0
    %v239 = vand.u32 %v23, 4294901760
    %v240 = vsub.f32 %v23, %v239
    %v241 = vand.u32 %v240, 4294901760
    %242 = vmatpush.msra.mxu0 %v241
    %v243 = vand.u32 %v22, 4294901760
    %v244 = vsub.f32 %v22, %v243
    %v245 = vand.u32 %v244, 4294901760
    %246 = vmatpush.msra.mxu0 %v245
    %v247 = vand.u32 %v21, 4294901760
    %v248 = vsub.f32 %v21, %v247
    %v249 = vand.u32 %v248, 4294901760
    %250 = vmatpush.msra.mxu0 %v249
    %v251 = vand.u32 %v20, 4294901760
    %v252 = vsub.f32 %v20, %v251
    %v253 = vand.u32 %v252, 4294901760
    %254 = vmatpush.msra.mxu0 %v253
    %v255 = vand.u32 %v72, 4294901760
    %256 = vmatmul.f32.gmra.mxu0 %v255
    %v257 = vpop.f32.mrf.mxu0
    %v258 = vadd.f32 %v219, %v257
    %v259 = vand.u32 %v75, 4294901760
    %260 = vmatmul.f32.gmra.mxu0 %v259
    %v261 = vpop.f32.mrf.mxu0
    %v262 = vadd.f32 %v225, %v261
    %263 = vdwg.mxu0
    %264 = vmatpush.msra.mxu0 0.0
    %265 = vmatpush.msra.mxu0 0.0
    %266 = vmatpush.msra.mxu0 0.0
    %267 = vmatpush.msra.mxu0 0.0
    %268 = vmatpush.msra.mxu0 0.0
    %269 = vmatpush.msra.mxu0 0.0
    %270 = vmatpush.msra.mxu0 0.0
    %271 = vmatpush.msra.mxu0 0.0
    %272 = vmatpush.msra.mxu0 0.0
    %273 = vmatpush.msra.mxu0 0.0
    %274 = vmatpush.msra.mxu0 0.0
    %275 = vmatpush.msra.mxu0 0.0
    %v276 = vand.u32 %v23, 4294901760
    %277 = vmatpush.msra.mxu0 %v276
    %v278 = vand.u32 %v22, 4294901760
    %279 = vmatpush.msra.mxu0 %v278
    %v280 = vand.u32 %v21, 4294901760
    %281 = vmatpush.msra.mxu0 %v280
    %v282 = vand.u32 %v20, 4294901760
    %283 = vmatpush.msra.mxu0 %v282
    %v284 = vand.u32 %v72, 4294901760
    %285 = vmatmul.f32.gmra.mxu0 %v284
    %v286 = vpop.f32.mrf.mxu0
    %v287 = vadd.f32 %v258, %v286
    %v288 = vand.u32 %v75, 4294901760
    %289 = vmatmul.f32.gmra.mxu0 %v288
    %v290 = vpop.f32.mrf.mxu0
    %v291 = vadd.f32 %v262, %v290
    %292 = vdwg.mxu0
    %v293 = vperm.slane %v64, 2
    %v295 = vsel %vm70, %v18, 0
    %v298 = vsel %vm70, %v19, 0
    %300 = vmatpush.msra.mxu0 0.0
    %301 = vmatpush.msra.mxu0 0.0
    %302 = vmatpush.msra.mxu0 0.0
    %303 = vmatpush.msra.mxu0 0.0
    %304 = vmatpush.msra.mxu0 0.0
    %305 = vmatpush.msra.mxu0 0.0
    %306 = vmatpush.msra.mxu0 0.0
    %307 = vmatpush.msra.mxu0 0.0
    %308 = vmatpush.msra.mxu0 0.0
    %309 = vmatpush.msra.mxu0 0.0
    %310 = vmatpush.msra.mxu0 0.0
    %311 = vmatpush.msra.mxu0 0.0
    %v312 = vand.u32 %v31, 4294901760
    %313 = vmatpush.msra.mxu0 %v312
    %v314 = vand.u32 %v30, 4294901760
    %315 = vmatpush.msra.mxu0 %v314
    %v316 = vand.u32 %v29, 4294901760
    %317 = vmatpush.msra.mxu0 %v316
    %v318 = vand.u32 %v28, 4294901760
    %319 = vmatpush.msra.mxu0 %v318
    %v320 = vand.u32 %v295, 4294901760
    %v321 = vsub.f32 %v295, %v320
    %v322 = vand.u32 %v321, 4294901760
    %v323 = vsub.f32 %v321, %v322
    %v324 = vand.u32 %v323, 4294901760
    %325 = vmatmul.f32.gmra.mxu0 %v324
    %v326 = vpop.f32.mrf.mxu0
    %v327 = vadd.f32 %v293, %v326
    %v328 = vand.u32 %v298, 4294901760
    %v329 = vsub.f32 %v298, %v328
    %v330 = vand.u32 %v329, 4294901760
    %v331 = vsub.f32 %v329, %v330
    %v332 = vand.u32 %v331, 4294901760
    %333 = vmatmul.f32.gmra.mxu0 %v332
    %v334 = vpop.f32.mrf.mxu0
    %v335 = vadd.f32 %v293, %v334
    %336 = vdwg.mxu0
    %337 = vmatpush.msra.mxu0 0.0
    %338 = vmatpush.msra.mxu0 0.0
    %339 = vmatpush.msra.mxu0 0.0
    %340 = vmatpush.msra.mxu0 0.0
    %341 = vmatpush.msra.mxu0 0.0
    %342 = vmatpush.msra.mxu0 0.0
    %343 = vmatpush.msra.mxu0 0.0
    %344 = vmatpush.msra.mxu0 0.0
    %345 = vmatpush.msra.mxu0 0.0
    %346 = vmatpush.msra.mxu0 0.0
    %347 = vmatpush.msra.mxu0 0.0
    %348 = vmatpush.msra.mxu0 0.0
    %v349 = vand.u32 %v31, 4294901760
    %v350 = vsub.f32 %v31, %v349
    %v351 = vand.u32 %v350, 4294901760
    %v352 = vsub.f32 %v350, %v351
    %v353 = vand.u32 %v352, 4294901760
    %354 = vmatpush.msra.mxu0 %v353
    %v355 = vand.u32 %v30, 4294901760
    %v356 = vsub.f32 %v30, %v355
    %v357 = vand.u32 %v356, 4294901760
    %v358 = vsub.f32 %v356, %v357
    %v359 = vand.u32 %v358, 4294901760
    %360 = vmatpush.msra.mxu0 %v359
    %v361 = vand.u32 %v29, 4294901760
    %v362 = vsub.f32 %v29, %v361
    %v363 = vand.u32 %v362, 4294901760
    %v364 = vsub.f32 %v362, %v363
    %v365 = vand.u32 %v364, 4294901760
    %366 = vmatpush.msra.mxu0 %v365
    %v367 = vand.u32 %v28, 4294901760
    %v368 = vsub.f32 %v28, %v367
    %v369 = vand.u32 %v368, 4294901760
    %v370 = vsub.f32 %v368, %v369
    %v371 = vand.u32 %v370, 4294901760
    %372 = vmatpush.msra.mxu0 %v371
    %v373 = vand.u32 %v295, 4294901760
    %374 = vmatmul.f32.gmra.mxu0 %v373
    %v375 = vpop.f32.mrf.mxu0
    %v376 = vadd.f32 %v327, %v375
    %v377 = vand.u32 %v298, 4294901760
    %378 = vmatmul.f32.gmra.mxu0 %v377
    %v379 = vpop.f32.mrf.mxu0
    %v380 = vadd.f32 %v335, %v379
    %381 = vdwg.mxu0
    %382 = vmatpush.msra.mxu0 0.0
    %383 = vmatpush.msra.mxu0 0.0
    %384 = vmatpush.msra.mxu0 0.0
    %385 = vmatpush.msra.mxu0 0.0
    %386 = vmatpush.msra.mxu0 0.0
    %387 = vmatpush.msra.mxu0 0.0
    %388 = vmatpush.msra.mxu0 0.0
    %389 = vmatpush.msra.mxu0 0.0
    %390 = vmatpush.msra.mxu0 0.0
    %391 = vmatpush.msra.mxu0 0.0
    %392 = vmatpush.msra.mxu0 0.0
    %393 = vmatpush.msra.mxu0 0.0
    %v394 = vand.u32 %v31, 4294901760
    %v395 = vsub.f32 %v31, %v394
    %396 = vmatpush.msra.mxu0 %v395
    %v397 = vand.u32 %v30, 4294901760
    %v398 = vsub.f32 %v30, %v397
    %399 = vmatpush.msra.mxu0 %v398
    %v400 = vand.u32 %v29, 4294901760
    %v401 = vsub.f32 %v29, %v400
    %402 = vmatpush.msra.mxu0 %v401
    %v403 = vand.u32 %v28, 4294901760
    %v404 = vsub.f32 %v28, %v403
    %405 = vmatpush.msra.mxu0 %v404
    %v406 = vand.u32 %v295, 4294901760
    %v407 = vsub.f32 %v295, %v406
    %408 = vmatmul.f32.gmra.mxu0 %v407
    %v409 = vpop.f32.mrf.mxu0
    %v410 = vadd.f32 %v376, %v409
    %v411 = vand.u32 %v298, 4294901760
    %v412 = vsub.f32 %v298, %v411
    %413 = vmatmul.f32.gmra.mxu0 %v412
    %v414 = vpop.f32.mrf.mxu0
    %v415 = vadd.f32 %v380, %v414
    %416 = vdwg.mxu0
    %417 = vmatpush.msra.mxu0 0.0
    %418 = vmatpush.msra.mxu0 0.0
    %419 = vmatpush.msra.mxu0 0.0
    %420 = vmatpush.msra.mxu0 0.0
    %421 = vmatpush.msra.mxu0 0.0
    %422 = vmatpush.msra.mxu0 0.0
    %423 = vmatpush.msra.mxu0 0.0
    %424 = vmatpush.msra.mxu0 0.0
    %425 = vmatpush.msra.mxu0 0.0
    %426 = vmatpush.msra.mxu0 0.0
    %427 = vmatpush.msra.mxu0 0.0
    %428 = vmatpush.msra.mxu0 0.0
    %v429 = vand.u32 %v31, 4294901760
    %430 = vmatpush.msra.mxu0 %v429
    %v431 = vand.u32 %v30, 4294901760
    %432 = vmatpush.msra.mxu0 %v431
    %v433 = vand.u32 %v29, 4294901760
    %434 = vmatpush.msra.mxu0 %v433
    %v435 = vand.u32 %v28, 4294901760
    %436 = vmatpush.msra.mxu0 %v435
    %v437 = vand.u32 %v295, 4294901760
    %v438 = vsub.f32 %v295, %v437
    %v439 = vand.u32 %v438, 4294901760
    %440 = vmatmul.f32.gmra.mxu0 %v439
    %v441 = vpop.f32.mrf.mxu0
    %v442 = vadd.f32 %v410, %v441
    %v443 = vand.u32 %v298, 4294901760
    %v444 = vsub.f32 %v298, %v443
    %v445 = vand.u32 %v444, 4294901760
    %446 = vmatmul.f32.gmra.mxu0 %v445
    %v447 = vpop.f32.mrf.mxu0
    %v448 = vadd.f32 %v415, %v447
    %449 = vdwg.mxu0
    %450 = vmatpush.msra.mxu0 0.0
    %451 = vmatpush.msra.mxu0 0.0
    %452 = vmatpush.msra.mxu0 0.0
    %453 = vmatpush.msra.mxu0 0.0
    %454 = vmatpush.msra.mxu0 0.0
    %455 = vmatpush.msra.mxu0 0.0
    %456 = vmatpush.msra.mxu0 0.0
    %457 = vmatpush.msra.mxu0 0.0
    %458 = vmatpush.msra.mxu0 0.0
    %459 = vmatpush.msra.mxu0 0.0
    %460 = vmatpush.msra.mxu0 0.0
    %461 = vmatpush.msra.mxu0 0.0
    %v462 = vand.u32 %v31, 4294901760
    %v463 = vsub.f32 %v31, %v462
    %v464 = vand.u32 %v463, 4294901760
    %465 = vmatpush.msra.mxu0 %v464
    %v466 = vand.u32 %v30, 4294901760
    %v467 = vsub.f32 %v30, %v466
    %v468 = vand.u32 %v467, 4294901760
    %469 = vmatpush.msra.mxu0 %v468
    %v470 = vand.u32 %v29, 4294901760
    %v471 = vsub.f32 %v29, %v470
    %v472 = vand.u32 %v471, 4294901760
    %473 = vmatpush.msra.mxu0 %v472
    %v474 = vand.u32 %v28, 4294901760
    %v475 = vsub.f32 %v28, %v474
    %v476 = vand.u32 %v475, 4294901760
    %477 = vmatpush.msra.mxu0 %v476
    %v478 = vand.u32 %v295, 4294901760
    %479 = vmatmul.f32.gmra.mxu0 %v478
    %v480 = vpop.f32.mrf.mxu0
    %v481 = vadd.f32 %v442, %v480
    %v482 = vand.u32 %v298, 4294901760
    %483 = vmatmul.f32.gmra.mxu0 %v482
    %v484 = vpop.f32.mrf.mxu0
    %v485 = vadd.f32 %v448, %v484
    %486 = vdwg.mxu0
    %487 = vmatpush.msra.mxu0 0.0
    %488 = vmatpush.msra.mxu0 0.0
    %489 = vmatpush.msra.mxu0 0.0
    %490 = vmatpush.msra.mxu0 0.0
    %491 = vmatpush.msra.mxu0 0.0
    %492 = vmatpush.msra.mxu0 0.0
    %493 = vmatpush.msra.mxu0 0.0
    %494 = vmatpush.msra.mxu0 0.0
    %495 = vmatpush.msra.mxu0 0.0
    %496 = vmatpush.msra.mxu0 0.0
    %497 = vmatpush.msra.mxu0 0.0
    %498 = vmatpush.msra.mxu0 0.0
    %v499 = vand.u32 %v31, 4294901760
    %500 = vmatpush.msra.mxu0 %v499
    %v501 = vand.u32 %v30, 4294901760
    %502 = vmatpush.msra.mxu0 %v501
    %v503 = vand.u32 %v29, 4294901760
    %504 = vmatpush.msra.mxu0 %v503
    %v505 = vand.u32 %v28, 4294901760
    %506 = vmatpush.msra.mxu0 %v505
    %v507 = vand.u32 %v295, 4294901760
    %508 = vmatmul.f32.gmra.mxu0 %v507
    %v509 = vpop.f32.mrf.mxu0
    %v510 = vadd.f32 %v481, %v509
    %v511 = vand.u32 %v298, 4294901760
    %512 = vmatmul.f32.gmra.mxu0 %v511
    %v513 = vpop.f32.mrf.mxu0
    %v514 = vadd.f32 %v485, %v513
    %515 = vdwg.mxu0
    %v516 = vperm.slane %v64, 1
    %517 = vmatpush.msra.mxu0 0.0
    %518 = vmatpush.msra.mxu0 0.0
    %519 = vmatpush.msra.mxu0 0.0
    %520 = vmatpush.msra.mxu0 0.0
    %521 = vmatpush.msra.mxu0 0.0
    %522 = vmatpush.msra.mxu0 0.0
    %523 = vmatpush.msra.mxu0 0.0
    %524 = vmatpush.msra.mxu0 0.0
    %525 = vmatpush.msra.mxu0 0.0
    %526 = vmatpush.msra.mxu0 0.0
    %527 = vmatpush.msra.mxu0 0.0
    %528 = vmatpush.msra.mxu0 0.0
    %v529 = vand.u32 %v27, 4294901760
    %530 = vmatpush.msra.mxu0 %v529
    %v531 = vand.u32 %v26, 4294901760
    %532 = vmatpush.msra.mxu0 %v531
    %v533 = vand.u32 %v25, 4294901760
    %534 = vmatpush.msra.mxu0 %v533
    %v535 = vand.u32 %v24, 4294901760
    %536 = vmatpush.msra.mxu0 %v535
    %v537 = vand.u32 %v295, 4294901760
    %v538 = vsub.f32 %v295, %v537
    %v539 = vand.u32 %v538, 4294901760
    %v540 = vsub.f32 %v538, %v539
    %v541 = vand.u32 %v540, 4294901760
    %542 = vmatmul.f32.gmra.mxu0 %v541
    %v543 = vpop.f32.mrf.mxu0
    %v544 = vadd.f32 %v516, %v543
    %v545 = vand.u32 %v298, 4294901760
    %v546 = vsub.f32 %v298, %v545
    %v547 = vand.u32 %v546, 4294901760
    %v548 = vsub.f32 %v546, %v547
    %v549 = vand.u32 %v548, 4294901760
    %550 = vmatmul.f32.gmra.mxu0 %v549
    %v551 = vpop.f32.mrf.mxu0
    %v552 = vadd.f32 %v516, %v551
    %553 = vdwg.mxu0
    %554 = vmatpush.msra.mxu0 0.0
    %555 = vmatpush.msra.mxu0 0.0
    %556 = vmatpush.msra.mxu0 0.0
    %557 = vmatpush.msra.mxu0 0.0
    %558 = vmatpush.msra.mxu0 0.0
    %559 = vmatpush.msra.mxu0 0.0
    %560 = vmatpush.msra.mxu0 0.0
    %561 = vmatpush.msra.mxu0 0.0
    %562 = vmatpush.msra.mxu0 0.0
    %563 = vmatpush.msra.mxu0 0.0
    %564 = vmatpush.msra.mxu0 0.0
    %565 = vmatpush.msra.mxu0 0.0
    %v566 = vand.u32 %v27, 4294901760
    %v567 = vsub.f32 %v27, %v566
    %v568 = vand.u32 %v567, 4294901760
    %v569 = vsub.f32 %v567, %v568
    %v570 = vand.u32 %v569, 4294901760
    %571 = vmatpush.msra.mxu0 %v570
    %v572 = vand.u32 %v26, 4294901760
    %v573 = vsub.f32 %v26, %v572
    %v574 = vand.u32 %v573, 4294901760
    %v575 = vsub.f32 %v573, %v574
    %v576 = vand.u32 %v575, 4294901760
    %577 = vmatpush.msra.mxu0 %v576
    %v578 = vand.u32 %v25, 4294901760
    %v579 = vsub.f32 %v25, %v578
    %v580 = vand.u32 %v579, 4294901760
    %v581 = vsub.f32 %v579, %v580
    %v582 = vand.u32 %v581, 4294901760
    %583 = vmatpush.msra.mxu0 %v582
    %v584 = vand.u32 %v24, 4294901760
    %v585 = vsub.f32 %v24, %v584
    %v586 = vand.u32 %v585, 4294901760
    %v587 = vsub.f32 %v585, %v586
    %v588 = vand.u32 %v587, 4294901760
    %589 = vmatpush.msra.mxu0 %v588
    %v590 = vand.u32 %v295, 4294901760
    %591 = vmatmul.f32.gmra.mxu0 %v590
    %v592 = vpop.f32.mrf.mxu0
    %v593 = vadd.f32 %v544, %v592
    %v594 = vand.u32 %v298, 4294901760
    %595 = vmatmul.f32.gmra.mxu0 %v594
    %v596 = vpop.f32.mrf.mxu0
    %v597 = vadd.f32 %v552, %v596
    %598 = vdwg.mxu0
    %599 = vmatpush.msra.mxu0 0.0
    %600 = vmatpush.msra.mxu0 0.0
    %601 = vmatpush.msra.mxu0 0.0
    %602 = vmatpush.msra.mxu0 0.0
    %603 = vmatpush.msra.mxu0 0.0
    %604 = vmatpush.msra.mxu0 0.0
    %605 = vmatpush.msra.mxu0 0.0
    %606 = vmatpush.msra.mxu0 0.0
    %607 = vmatpush.msra.mxu0 0.0
    %608 = vmatpush.msra.mxu0 0.0
    %609 = vmatpush.msra.mxu0 0.0
    %610 = vmatpush.msra.mxu0 0.0
    %v611 = vand.u32 %v27, 4294901760
    %v612 = vsub.f32 %v27, %v611
    %613 = vmatpush.msra.mxu0 %v612
    %v614 = vand.u32 %v26, 4294901760
    %v615 = vsub.f32 %v26, %v614
    %616 = vmatpush.msra.mxu0 %v615
    %v617 = vand.u32 %v25, 4294901760
    %v618 = vsub.f32 %v25, %v617
    %619 = vmatpush.msra.mxu0 %v618
    %v620 = vand.u32 %v24, 4294901760
    %v621 = vsub.f32 %v24, %v620
    %622 = vmatpush.msra.mxu0 %v621
    %v623 = vand.u32 %v295, 4294901760
    %v624 = vsub.f32 %v295, %v623
    %625 = vmatmul.f32.gmra.mxu0 %v624
    %v626 = vpop.f32.mrf.mxu0
    %v627 = vadd.f32 %v593, %v626
    %v628 = vand.u32 %v298, 4294901760
    %v629 = vsub.f32 %v298, %v628
    %630 = vmatmul.f32.gmra.mxu0 %v629
    %v631 = vpop.f32.mrf.mxu0
    %v632 = vadd.f32 %v597, %v631
    %633 = vdwg.mxu0
    %634 = vmatpush.msra.mxu0 0.0
    %635 = vmatpush.msra.mxu0 0.0
    %636 = vmatpush.msra.mxu0 0.0
    %637 = vmatpush.msra.mxu0 0.0
    %638 = vmatpush.msra.mxu0 0.0
    %639 = vmatpush.msra.mxu0 0.0
    %640 = vmatpush.msra.mxu0 0.0
    %641 = vmatpush.msra.mxu0 0.0
    %642 = vmatpush.msra.mxu0 0.0
    %643 = vmatpush.msra.mxu0 0.0
    %644 = vmatpush.msra.mxu0 0.0
    %645 = vmatpush.msra.mxu0 0.0
    %v646 = vand.u32 %v27, 4294901760
    %647 = vmatpush.msra.mxu0 %v646
    %v648 = vand.u32 %v26, 4294901760
    %649 = vmatpush.msra.mxu0 %v648
    %v650 = vand.u32 %v25, 4294901760
    %651 = vmatpush.msra.mxu0 %v650
    %v652 = vand.u32 %v24, 4294901760
    %653 = vmatpush.msra.mxu0 %v652
    %v654 = vand.u32 %v295, 4294901760
    %v655 = vsub.f32 %v295, %v654
    %v656 = vand.u32 %v655, 4294901760
    %657 = vmatmul.f32.gmra.mxu0 %v656
    %v658 = vpop.f32.mrf.mxu0
    %v659 = vadd.f32 %v627, %v658
    %v660 = vand.u32 %v298, 4294901760
    %v661 = vsub.f32 %v298, %v660
    %v662 = vand.u32 %v661, 4294901760
    %663 = vmatmul.f32.gmra.mxu0 %v662
    %v664 = vpop.f32.mrf.mxu0
    %v665 = vadd.f32 %v632, %v664
    %666 = vdwg.mxu0
    %667 = vmatpush.msra.mxu0 0.0
    %668 = vmatpush.msra.mxu0 0.0
    %669 = vmatpush.msra.mxu0 0.0
    %670 = vmatpush.msra.mxu0 0.0
    %671 = vmatpush.msra.mxu0 0.0
    %672 = vmatpush.msra.mxu0 0.0
    %673 = vmatpush.msra.mxu0 0.0
    %674 = vmatpush.msra.mxu0 0.0
    %675 = vmatpush.msra.mxu0 0.0
    %676 = vmatpush.msra.mxu0 0.0
    %677 = vmatpush.msra.mxu0 0.0
    %678 = vmatpush.msra.mxu0 0.0
    %v679 = vand.u32 %v27, 4294901760
    %v680 = vsub.f32 %v27, %v679
    %v681 = vand.u32 %v680, 4294901760
    %682 = vmatpush.msra.mxu0 %v681
    %v683 = vand.u32 %v26, 4294901760
    %v684 = vsub.f32 %v26, %v683
    %v685 = vand.u32 %v684, 4294901760
    %686 = vmatpush.msra.mxu0 %v685
    %v687 = vand.u32 %v25, 4294901760
    %v688 = vsub.f32 %v25, %v687
    %v689 = vand.u32 %v688, 4294901760
    %690 = vmatpush.msra.mxu0 %v689
    %v691 = vand.u32 %v24, 4294901760
    %v692 = vsub.f32 %v24, %v691
    %v693 = vand.u32 %v692, 4294901760
    %694 = vmatpush.msra.mxu0 %v693
    %v695 = vand.u32 %v295, 4294901760
    %696 = vmatmul.f32.gmra.mxu0 %v695
    %v697 = vpop.f32.mrf.mxu0
    %v698 = vadd.f32 %v659, %v697
    %v699 = vand.u32 %v298, 4294901760
    %700 = vmatmul.f32.gmra.mxu0 %v699
    %v701 = vpop.f32.mrf.mxu0
    %v702 = vadd.f32 %v665, %v701
    %703 = vdwg.mxu0
    %704 = vmatpush.msra.mxu0 0.0
    %705 = vmatpush.msra.mxu0 0.0
    %706 = vmatpush.msra.mxu0 0.0
    %707 = vmatpush.msra.mxu0 0.0
    %708 = vmatpush.msra.mxu0 0.0
    %709 = vmatpush.msra.mxu0 0.0
    %710 = vmatpush.msra.mxu0 0.0
    %711 = vmatpush.msra.mxu0 0.0
    %712 = vmatpush.msra.mxu0 0.0
    %713 = vmatpush.msra.mxu0 0.0
    %714 = vmatpush.msra.mxu0 0.0
    %715 = vmatpush.msra.mxu0 0.0
    %v716 = vand.u32 %v27, 4294901760
    %717 = vmatpush.msra.mxu0 %v716
    %v718 = vand.u32 %v26, 4294901760
    %719 = vmatpush.msra.mxu0 %v718
    %v720 = vand.u32 %v25, 4294901760
    %721 = vmatpush.msra.mxu0 %v720
    %v722 = vand.u32 %v24, 4294901760
    %723 = vmatpush.msra.mxu0 %v722
    %v724 = vand.u32 %v295, 4294901760
    %725 = vmatmul.f32.gmra.mxu0 %v724
    %v726 = vpop.f32.mrf.mxu0
    %v727 = vadd.f32 %v698, %v726
    %v728 = vand.u32 %v298, 4294901760
    %729 = vmatmul.f32.gmra.mxu0 %v728
    %v730 = vpop.f32.mrf.mxu0
    %v731 = vadd.f32 %v702, %v730
    %732 = vdwg.mxu0
    %v733 = vmul.f32 %v510, %v48
    %v734 = vmul.f32 %v514, %v49
    %v735 = vmul.f32 %v510, %v50
    %v736 = vmul.f32 %v514, %v51
    %v737 = vmul.f32 %v510, %v52
    %v738 = vmul.f32 %v514, %v53
    %v739 = vmul.f32 %v510, %v54
    %v740 = vmul.f32 %v514, %v55
    %v741 = vmul.f32 %v510, %v56
    %v742 = vmul.f32 %v514, %v57
    %v743 = vmul.f32 %v510, %v58
    %v744 = vmul.f32 %v514, %v59
    %v745 = vmul.f32 %v510, %v60
    %v746 = vmul.f32 %v514, %v61
    %v747 = vmul.f32 %v510, %v62
    %v748 = vmul.f32 %v514, %v63
    %v749 = vmul.f32 %v727, %v48
    %v750 = vmul.f32 %v731, %v49
    %v751 = vmul.f32 %v727, %v50
    %v752 = vmul.f32 %v731, %v51
    %v753 = vmul.f32 %v727, %v52
    %v754 = vmul.f32 %v731, %v53
    %v755 = vmul.f32 %v727, %v54
    %v756 = vmul.f32 %v731, %v55
    %v757 = vmul.f32 %v727, %v56
    %v758 = vmul.f32 %v731, %v57
    %v759 = vmul.f32 %v727, %v58
    %v760 = vmul.f32 %v731, %v59
    %v761 = vmul.f32 %v727, %v60
    %v762 = vmul.f32 %v731, %v61
    %v763 = vmul.f32 %v727, %v62
    %v764 = vmul.f32 %v731, %v63
    %v766 = vsel %vm70, %v287, 0
    %v769 = vsel %vm70, %v291, 0
    %v772 = vsel %vm70, %v733, 0
    %v775 = vsel %vm70, %v734, 0
    %v778 = vsel %vm70, %v735, 0
    %v781 = vsel %vm70, %v736, 0
    %v784 = vsel %vm70, %v737, 0
    %v787 = vsel %vm70, %v738, 0
    %v790 = vsel %vm70, %v739, 0
    %v793 = vsel %vm70, %v740, 0
    %v796 = vsel %vm70, %v741, 0
    %v799 = vsel %vm70, %v742, 0
    %v802 = vsel %vm70, %v743, 0
    %v805 = vsel %vm70, %v744, 0
    %v808 = vsel %vm70, %v745, 0
    %v811 = vsel %vm70, %v746, 0
    %v814 = vsel %vm70, %v747, 0
    %v817 = vsel %vm70, %v748, 0
    %v819 = vand.u32 %v817, 4294901760
    %820 = vmatpush.xpose.msra.mxu0 %v819
    %v821 = vand.u32 %v814, 4294901760
    %822 = vmatpush.xpose.msra.mxu0 %v821
    %v823 = vand.u32 %v811, 4294901760
    %824 = vmatpush.xpose.msra.mxu0 %v823
    %v825 = vand.u32 %v808, 4294901760
    %826 = vmatpush.xpose.msra.mxu0 %v825
    %v827 = vand.u32 %v805, 4294901760
    %828 = vmatpush.xpose.msra.mxu0 %v827
    %v829 = vand.u32 %v802, 4294901760
    %830 = vmatpush.xpose.msra.mxu0 %v829
    %v831 = vand.u32 %v799, 4294901760
    %832 = vmatpush.xpose.msra.mxu0 %v831
    %v833 = vand.u32 %v796, 4294901760
    %834 = vmatpush.xpose.msra.mxu0 %v833
    %v835 = vand.u32 %v793, 4294901760
    %836 = vmatpush.xpose.msra.mxu0 %v835
    %v837 = vand.u32 %v790, 4294901760
    %838 = vmatpush.xpose.msra.mxu0 %v837
    %v839 = vand.u32 %v787, 4294901760
    %840 = vmatpush.xpose.msra.mxu0 %v839
    %v841 = vand.u32 %v784, 4294901760
    %842 = vmatpush.xpose.msra.mxu0 %v841
    %v843 = vand.u32 %v781, 4294901760
    %844 = vmatpush.xpose.msra.mxu0 %v843
    %v845 = vand.u32 %v778, 4294901760
    %846 = vmatpush.xpose.msra.mxu0 %v845
    %v847 = vand.u32 %v775, 4294901760
    %848 = vmatpush.xpose.msra.mxu0 %v847
    %v849 = vand.u32 %v772, 4294901760
    %850 = vmatpush.xpose.msra.mxu0 %v849
    %v851 = vand.u32 %v766, 4294901760
    %v852 = vsub.f32 %v766, %v851
    %v853 = vand.u32 %v852, 4294901760
    %v854 = vsub.f32 %v852, %v853
    %v855 = vand.u32 %v854, 4294901760
    %856 = vmatmul.f32.gmra.mxu0 %v855
    %v857 = vpop.f32.mrf.mxu0
    %v858 = vadd.f32 0.0, %v857
    %v859 = vand.u32 %v769, 4294901760
    %v860 = vsub.f32 %v769, %v859
    %v861 = vand.u32 %v860, 4294901760
    %v862 = vsub.f32 %v860, %v861
    %v863 = vand.u32 %v862, 4294901760
    %864 = vmatmul.f32.gmra.mxu0 %v863
    %v865 = vpop.f32.mrf.mxu0
    %v866 = vadd.f32 0.0, %v865
    %867 = vdwg.mxu0
    %v868 = vand.u32 %v817, 4294901760
    %v869 = vsub.f32 %v817, %v868
    %v870 = vand.u32 %v869, 4294901760
    %v871 = vsub.f32 %v869, %v870
    %v872 = vand.u32 %v871, 4294901760
    %873 = vmatpush.xpose.msra.mxu0 %v872
    %v874 = vand.u32 %v814, 4294901760
    %v875 = vsub.f32 %v814, %v874
    %v876 = vand.u32 %v875, 4294901760
    %v877 = vsub.f32 %v875, %v876
    %v878 = vand.u32 %v877, 4294901760
    %879 = vmatpush.xpose.msra.mxu0 %v878
    %v880 = vand.u32 %v811, 4294901760
    %v881 = vsub.f32 %v811, %v880
    %v882 = vand.u32 %v881, 4294901760
    %v883 = vsub.f32 %v881, %v882
    %v884 = vand.u32 %v883, 4294901760
    %885 = vmatpush.xpose.msra.mxu0 %v884
    %v886 = vand.u32 %v808, 4294901760
    %v887 = vsub.f32 %v808, %v886
    %v888 = vand.u32 %v887, 4294901760
    %v889 = vsub.f32 %v887, %v888
    %v890 = vand.u32 %v889, 4294901760
    %891 = vmatpush.xpose.msra.mxu0 %v890
    %v892 = vand.u32 %v805, 4294901760
    %v893 = vsub.f32 %v805, %v892
    %v894 = vand.u32 %v893, 4294901760
    %v895 = vsub.f32 %v893, %v894
    %v896 = vand.u32 %v895, 4294901760
    %897 = vmatpush.xpose.msra.mxu0 %v896
    %v898 = vand.u32 %v802, 4294901760
    %v899 = vsub.f32 %v802, %v898
    %v900 = vand.u32 %v899, 4294901760
    %v901 = vsub.f32 %v899, %v900
    %v902 = vand.u32 %v901, 4294901760
    %903 = vmatpush.xpose.msra.mxu0 %v902
    %v904 = vand.u32 %v799, 4294901760
    %v905 = vsub.f32 %v799, %v904
    %v906 = vand.u32 %v905, 4294901760
    %v907 = vsub.f32 %v905, %v906
    %v908 = vand.u32 %v907, 4294901760
    %909 = vmatpush.xpose.msra.mxu0 %v908
    %v910 = vand.u32 %v796, 4294901760
    %v911 = vsub.f32 %v796, %v910
    %v912 = vand.u32 %v911, 4294901760
    %v913 = vsub.f32 %v911, %v912
    %v914 = vand.u32 %v913, 4294901760
    %915 = vmatpush.xpose.msra.mxu0 %v914
    %v916 = vand.u32 %v793, 4294901760
    %v917 = vsub.f32 %v793, %v916
    %v918 = vand.u32 %v917, 4294901760
    %v919 = vsub.f32 %v917, %v918
    %v920 = vand.u32 %v919, 4294901760
    %921 = vmatpush.xpose.msra.mxu0 %v920
    %v922 = vand.u32 %v790, 4294901760
    %v923 = vsub.f32 %v790, %v922
    %v924 = vand.u32 %v923, 4294901760
    %v925 = vsub.f32 %v923, %v924
    %v926 = vand.u32 %v925, 4294901760
    %927 = vmatpush.xpose.msra.mxu0 %v926
    %v928 = vand.u32 %v787, 4294901760
    %v929 = vsub.f32 %v787, %v928
    %v930 = vand.u32 %v929, 4294901760
    %v931 = vsub.f32 %v929, %v930
    %v932 = vand.u32 %v931, 4294901760
    %933 = vmatpush.xpose.msra.mxu0 %v932
    %v934 = vand.u32 %v784, 4294901760
    %v935 = vsub.f32 %v784, %v934
    %v936 = vand.u32 %v935, 4294901760
    %v937 = vsub.f32 %v935, %v936
    %v938 = vand.u32 %v937, 4294901760
    %939 = vmatpush.xpose.msra.mxu0 %v938
    %v940 = vand.u32 %v781, 4294901760
    %v941 = vsub.f32 %v781, %v940
    %v942 = vand.u32 %v941, 4294901760
    %v943 = vsub.f32 %v941, %v942
    %v944 = vand.u32 %v943, 4294901760
    %945 = vmatpush.xpose.msra.mxu0 %v944
    %v946 = vand.u32 %v778, 4294901760
    %v947 = vsub.f32 %v778, %v946
    %v948 = vand.u32 %v947, 4294901760
    %v949 = vsub.f32 %v947, %v948
    %v950 = vand.u32 %v949, 4294901760
    %951 = vmatpush.xpose.msra.mxu0 %v950
    %v952 = vand.u32 %v775, 4294901760
    %v953 = vsub.f32 %v775, %v952
    %v954 = vand.u32 %v953, 4294901760
    %v955 = vsub.f32 %v953, %v954
    %v956 = vand.u32 %v955, 4294901760
    %957 = vmatpush.xpose.msra.mxu0 %v956
    %v958 = vand.u32 %v772, 4294901760
    %v959 = vsub.f32 %v772, %v958
    %v960 = vand.u32 %v959, 4294901760
    %v961 = vsub.f32 %v959, %v960
    %v962 = vand.u32 %v961, 4294901760
    %963 = vmatpush.xpose.msra.mxu0 %v962
    %v964 = vand.u32 %v766, 4294901760
    %965 = vmatmul.f32.gmra.mxu0 %v964
    %v966 = vpop.f32.mrf.mxu0
    %v967 = vadd.f32 %v858, %v966
    %v968 = vand.u32 %v769, 4294901760
    %969 = vmatmul.f32.gmra.mxu0 %v968
    %v970 = vpop.f32.mrf.mxu0
    %v971 = vadd.f32 %v866, %v970
    %972 = vdwg.mxu0
    %v973 = vand.u32 %v817, 4294901760
    %v974 = vsub.f32 %v817, %v973
    %975 = vmatpush.xpose.msra.mxu0 %v974
    %v976 = vand.u32 %v814, 4294901760
    %v977 = vsub.f32 %v814, %v976
    %978 = vmatpush.xpose.msra.mxu0 %v977
    %v979 = vand.u32 %v811, 4294901760
    %v980 = vsub.f32 %v811, %v979
    %981 = vmatpush.xpose.msra.mxu0 %v980
    %v982 = vand.u32 %v808, 4294901760
    %v983 = vsub.f32 %v808, %v982
    %984 = vmatpush.xpose.msra.mxu0 %v983
    %v985 = vand.u32 %v805, 4294901760
    %v986 = vsub.f32 %v805, %v985
    %987 = vmatpush.xpose.msra.mxu0 %v986
    %v988 = vand.u32 %v802, 4294901760
    %v989 = vsub.f32 %v802, %v988
    %990 = vmatpush.xpose.msra.mxu0 %v989
    %v991 = vand.u32 %v799, 4294901760
    %v992 = vsub.f32 %v799, %v991
    %993 = vmatpush.xpose.msra.mxu0 %v992
    %v994 = vand.u32 %v796, 4294901760
    %v995 = vsub.f32 %v796, %v994
    %996 = vmatpush.xpose.msra.mxu0 %v995
    %v997 = vand.u32 %v793, 4294901760
    %v998 = vsub.f32 %v793, %v997
    %999 = vmatpush.xpose.msra.mxu0 %v998
    %v1000 = vand.u32 %v790, 4294901760
    %v1001 = vsub.f32 %v790, %v1000
    %1002 = vmatpush.xpose.msra.mxu0 %v1001
    %v1003 = vand.u32 %v787, 4294901760
    %v1004 = vsub.f32 %v787, %v1003
    %1005 = vmatpush.xpose.msra.mxu0 %v1004
    %v1006 = vand.u32 %v784, 4294901760
    %v1007 = vsub.f32 %v784, %v1006
    %1008 = vmatpush.xpose.msra.mxu0 %v1007
    %v1009 = vand.u32 %v781, 4294901760
    %v1010 = vsub.f32 %v781, %v1009
    %1011 = vmatpush.xpose.msra.mxu0 %v1010
    %v1012 = vand.u32 %v778, 4294901760
    %v1013 = vsub.f32 %v778, %v1012
    %1014 = vmatpush.xpose.msra.mxu0 %v1013
    %v1015 = vand.u32 %v775, 4294901760
    %v1016 = vsub.f32 %v775, %v1015
    %1017 = vmatpush.xpose.msra.mxu0 %v1016
    %v1018 = vand.u32 %v772, 4294901760
    %v1019 = vsub.f32 %v772, %v1018
    %1020 = vmatpush.xpose.msra.mxu0 %v1019
    %v1021 = vand.u32 %v766, 4294901760
    %v1022 = vsub.f32 %v766, %v1021
    %1023 = vmatmul.f32.gmra.mxu0 %v1022
    %v1024 = vpop.f32.mrf.mxu0
    %v1025 = vadd.f32 %v967, %v1024
    %v1026 = vand.u32 %v769, 4294901760
    %v1027 = vsub.f32 %v769, %v1026
    %1028 = vmatmul.f32.gmra.mxu0 %v1027
    %v1029 = vpop.f32.mrf.mxu0
    %v1030 = vadd.f32 %v971, %v1029
    %1031 = vdwg.mxu0
    %v1032 = vand.u32 %v817, 4294901760
    %1033 = vmatpush.xpose.msra.mxu0 %v1032
    %v1034 = vand.u32 %v814, 4294901760
    %1035 = vmatpush.xpose.msra.mxu0 %v1034
    %v1036 = vand.u32 %v811, 4294901760
    %1037 = vmatpush.xpose.msra.mxu0 %v1036
    %v1038 = vand.u32 %v808, 4294901760
    %1039 = vmatpush.xpose.msra.mxu0 %v1038
    %v1040 = vand.u32 %v805, 4294901760
    %1041 = vmatpush.xpose.msra.mxu0 %v1040
    %v1042 = vand.u32 %v802, 4294901760
    %1043 = vmatpush.xpose.msra.mxu0 %v1042
    %v1044 = vand.u32 %v799, 4294901760
    %1045 = vmatpush.xpose.msra.mxu0 %v1044
    %v1046 = vand.u32 %v796, 4294901760
    %1047 = vmatpush.xpose.msra.mxu0 %v1046
    %v1048 = vand.u32 %v793, 4294901760
    %1049 = vmatpush.xpose.msra.mxu0 %v1048
    %v1050 = vand.u32 %v790, 4294901760
    %1051 = vmatpush.xpose.msra.mxu0 %v1050
    %v1052 = vand.u32 %v787, 4294901760
    %1053 = vmatpush.xpose.msra.mxu0 %v1052
    %v1054 = vand.u32 %v784, 4294901760
    %1055 = vmatpush.xpose.msra.mxu0 %v1054
    %v1056 = vand.u32 %v781, 4294901760
    %1057 = vmatpush.xpose.msra.mxu0 %v1056
    %v1058 = vand.u32 %v778, 4294901760
    %1059 = vmatpush.xpose.msra.mxu0 %v1058
    %v1060 = vand.u32 %v775, 4294901760
    %1061 = vmatpush.xpose.msra.mxu0 %v1060
    %v1062 = vand.u32 %v772, 4294901760
    %1063 = vmatpush.xpose.msra.mxu0 %v1062
    %v1064 = vand.u32 %v766, 4294901760
    %v1065 = vsub.f32 %v766, %v1064
    %v1066 = vand.u32 %v1065, 4294901760
    %1067 = vmatmul.f32.gmra.mxu0 %v1066
    %v1068 = vpop.f32.mrf.mxu0
    %v1069 = vadd.f32 %v1025, %v1068
    %v1070 = vand.u32 %v769, 4294901760
    %v1071 = vsub.f32 %v769, %v1070
    %v1072 = vand.u32 %v1071, 4294901760
    %1073 = vmatmul.f32.gmra.mxu0 %v1072
    %v1074 = vpop.f32.mrf.mxu0
    %v1075 = vadd.f32 %v1030, %v1074
    %1076 = vdwg.mxu0
    %v1077 = vand.u32 %v817, 4294901760
    %v1078 = vsub.f32 %v817, %v1077
    %v1079 = vand.u32 %v1078, 4294901760
    %1080 = vmatpush.xpose.msra.mxu0 %v1079
    %v1081 = vand.u32 %v814, 4294901760
    %v1082 = vsub.f32 %v814, %v1081
    %v1083 = vand.u32 %v1082, 4294901760
    %1084 = vmatpush.xpose.msra.mxu0 %v1083
    %v1085 = vand.u32 %v811, 4294901760
    %v1086 = vsub.f32 %v811, %v1085
    %v1087 = vand.u32 %v1086, 4294901760
    %1088 = vmatpush.xpose.msra.mxu0 %v1087
    %v1089 = vand.u32 %v808, 4294901760
    %v1090 = vsub.f32 %v808, %v1089
    %v1091 = vand.u32 %v1090, 4294901760
    %1092 = vmatpush.xpose.msra.mxu0 %v1091
    %v1093 = vand.u32 %v805, 4294901760
    %v1094 = vsub.f32 %v805, %v1093
    %v1095 = vand.u32 %v1094, 4294901760
    %1096 = vmatpush.xpose.msra.mxu0 %v1095
    %v1097 = vand.u32 %v802, 4294901760
    %v1098 = vsub.f32 %v802, %v1097
    %v1099 = vand.u32 %v1098, 4294901760
    %1100 = vmatpush.xpose.msra.mxu0 %v1099
    %v1101 = vand.u32 %v799, 4294901760
    %v1102 = vsub.f32 %v799, %v1101
    %v1103 = vand.u32 %v1102, 4294901760
    %1104 = vmatpush.xpose.msra.mxu0 %v1103
    %v1105 = vand.u32 %v796, 4294901760
    %v1106 = vsub.f32 %v796, %v1105
    %v1107 = vand.u32 %v1106, 4294901760
    %1108 = vmatpush.xpose.msra.mxu0 %v1107
    %v1109 = vand.u32 %v793, 4294901760
    %v1110 = vsub.f32 %v793, %v1109
    %v1111 = vand.u32 %v1110, 4294901760
    %1112 = vmatpush.xpose.msra.mxu0 %v1111
    %v1113 = vand.u32 %v790, 4294901760
    %v1114 = vsub.f32 %v790, %v1113
    %v1115 = vand.u32 %v1114, 4294901760
    %1116 = vmatpush.xpose.msra.mxu0 %v1115
    %v1117 = vand.u32 %v787, 4294901760
    %v1118 = vsub.f32 %v787, %v1117
    %v1119 = vand.u32 %v1118, 4294901760
    %1120 = vmatpush.xpose.msra.mxu0 %v1119
    %v1121 = vand.u32 %v784, 4294901760
    %v1122 = vsub.f32 %v784, %v1121
    %v1123 = vand.u32 %v1122, 4294901760
    %1124 = vmatpush.xpose.msra.mxu0 %v1123
    %v1125 = vand.u32 %v781, 4294901760
    %v1126 = vsub.f32 %v781, %v1125
    %v1127 = vand.u32 %v1126, 4294901760
    %1128 = vmatpush.xpose.msra.mxu0 %v1127
    %v1129 = vand.u32 %v778, 4294901760
    %v1130 = vsub.f32 %v778, %v1129
    %v1131 = vand.u32 %v1130, 4294901760
    %1132 = vmatpush.xpose.msra.mxu0 %v1131
    %v1133 = vand.u32 %v775, 4294901760
    %v1134 = vsub.f32 %v775, %v1133
    %v1135 = vand.u32 %v1134, 4294901760
    %1136 = vmatpush.xpose.msra.mxu0 %v1135
    %v1137 = vand.u32 %v772, 4294901760
    %v1138 = vsub.f32 %v772, %v1137
    %v1139 = vand.u32 %v1138, 4294901760
    %1140 = vmatpush.xpose.msra.mxu0 %v1139
    %v1141 = vand.u32 %v766, 4294901760
    %1142 = vmatmul.f32.gmra.mxu0 %v1141
    %v1143 = vpop.f32.mrf.mxu0
    %v1144 = vadd.f32 %v1069, %v1143
    %v1145 = vand.u32 %v769, 4294901760
    %1146 = vmatmul.f32.gmra.mxu0 %v1145
    %v1147 = vpop.f32.mrf.mxu0
    %v1148 = vadd.f32 %v1075, %v1147
    %1149 = vdwg.mxu0
    %v1150 = vand.u32 %v817, 4294901760
    %1151 = vmatpush.xpose.msra.mxu0 %v1150
    %v1152 = vand.u32 %v814, 4294901760
    %1153 = vmatpush.xpose.msra.mxu0 %v1152
    %v1154 = vand.u32 %v811, 4294901760
    %1155 = vmatpush.xpose.msra.mxu0 %v1154
    %v1156 = vand.u32 %v808, 4294901760
    %1157 = vmatpush.xpose.msra.mxu0 %v1156
    %v1158 = vand.u32 %v805, 4294901760
    %1159 = vmatpush.xpose.msra.mxu0 %v1158
    %v1160 = vand.u32 %v802, 4294901760
    %1161 = vmatpush.xpose.msra.mxu0 %v1160
    %v1162 = vand.u32 %v799, 4294901760
    %1163 = vmatpush.xpose.msra.mxu0 %v1162
    %v1164 = vand.u32 %v796, 4294901760
    %1165 = vmatpush.xpose.msra.mxu0 %v1164
    %v1166 = vand.u32 %v793, 4294901760
    %1167 = vmatpush.xpose.msra.mxu0 %v1166
    %v1168 = vand.u32 %v790, 4294901760
    %1169 = vmatpush.xpose.msra.mxu0 %v1168
    %v1170 = vand.u32 %v787, 4294901760
    %1171 = vmatpush.xpose.msra.mxu0 %v1170
    %v1172 = vand.u32 %v784, 4294901760
    %1173 = vmatpush.xpose.msra.mxu0 %v1172
    %v1174 = vand.u32 %v781, 4294901760
    %1175 = vmatpush.xpose.msra.mxu0 %v1174
    %v1176 = vand.u32 %v778, 4294901760
    %1177 = vmatpush.xpose.msra.mxu0 %v1176
    %v1178 = vand.u32 %v775, 4294901760
    %1179 = vmatpush.xpose.msra.mxu0 %v1178
    %v1180 = vand.u32 %v772, 4294901760
    %1181 = vmatpush.xpose.msra.mxu0 %v1180
    %v1182 = vand.u32 %v766, 4294901760
    %1183 = vmatmul.f32.gmra.mxu0 %v1182
    %v1184 = vpop.f32.mrf.mxu0
    %v1185 = vadd.f32 %v1144, %v1184
    %v1186 = vand.u32 %v769, 4294901760
    %1187 = vmatmul.f32.gmra.mxu0 %v1186
    %v1188 = vpop.f32.mrf.mxu0
    %v1189 = vadd.f32 %v1148, %v1188
    %1190 = vdwg.mxu0
    %v1191 = vmul.f32 %v1185, 0.5
    %v1192 = vmul.f32 %v1189, 0.5
    %v1193 = vld [vmem:[%s3] sm:$0xff]
    %v1194 = vld [vmem:[%s3 + $0x8] sm:$0xff]
    %v1195 = vadd.f32 %v1191, %v1193
    %v1196 = vadd.f32 %v1192, %v1194
    %1197 = vmax.xlane.f32.xlu0 %v1195
    %v1198 = vpop.xlane.xlu0 %1197
    %1199 = vmax.xlane.f32.xlu0 %v1196
    %v1200 = vpop.xlane.xlu0 %1199
    %v1201 = vsub.f32 %v1195, %v1198
    %v1202 = vsub.f32 %v1196, %v1200
    %v1203 = vmul.f32 %v1201, 1.442695
    %v1204 = vpow.pop %v1203
    %v1205 = vmul.f32 %v1202, 1.442695
    %v1206 = vpow.pop %v1205
    %v1207 = vand.u32 %v63, 4294901760
    %1208 = vmatpush.msra.mxu0 %v1207
    %v1209 = vand.u32 %v62, 4294901760
    %1210 = vmatpush.msra.mxu0 %v1209
    %v1211 = vand.u32 %v61, 4294901760
    %1212 = vmatpush.msra.mxu0 %v1211
    %v1213 = vand.u32 %v60, 4294901760
    %1214 = vmatpush.msra.mxu0 %v1213
    %v1215 = vand.u32 %v59, 4294901760
    %1216 = vmatpush.msra.mxu0 %v1215
    %v1217 = vand.u32 %v58, 4294901760
    %1218 = vmatpush.msra.mxu0 %v1217
    %v1219 = vand.u32 %v57, 4294901760
    %1220 = vmatpush.msra.mxu0 %v1219
    %v1221 = vand.u32 %v56, 4294901760
    %1222 = vmatpush.msra.mxu0 %v1221
    %v1223 = vand.u32 %v55, 4294901760
    %1224 = vmatpush.msra.mxu0 %v1223
    %v1225 = vand.u32 %v54, 4294901760
    %1226 = vmatpush.msra.mxu0 %v1225
    %v1227 = vand.u32 %v53, 4294901760
    %1228 = vmatpush.msra.mxu0 %v1227
    %v1229 = vand.u32 %v52, 4294901760
    %1230 = vmatpush.msra.mxu0 %v1229
    %v1231 = vand.u32 %v51, 4294901760
    %1232 = vmatpush.msra.mxu0 %v1231
    %v1233 = vand.u32 %v50, 4294901760
    %1234 = vmatpush.msra.mxu0 %v1233
    %v1235 = vand.u32 %v49, 4294901760
    %1236 = vmatpush.msra.mxu0 %v1235
    %v1237 = vand.u32 %v48, 4294901760
    %1238 = vmatpush.msra.mxu0 %v1237
    %v1239 = vand.u32 %v1204, 4294901760
    %v1240 = vsub.f32 %v1204, %v1239
    %v1241 = vand.u32 %v1240, 4294901760
    %v1242 = vsub.f32 %v1240, %v1241
    %v1243 = vand.u32 %v1242, 4294901760
    %1244 = vmatmul.f32.gmra.mxu0 %v1243
    %v1245 = vpop.f32.mrf.mxu0
    %v1246 = vadd.f32 0.0, %v1245
    %v1247 = vand.u32 %v1206, 4294901760
    %v1248 = vsub.f32 %v1206, %v1247
    %v1249 = vand.u32 %v1248, 4294901760
    %v1250 = vsub.f32 %v1248, %v1249
    %v1251 = vand.u32 %v1250, 4294901760
    %1252 = vmatmul.f32.gmra.mxu0 %v1251
    %v1253 = vpop.f32.mrf.mxu0
    %v1254 = vadd.f32 0.0, %v1253
    %1255 = vdwg.mxu0
    %v1256 = vand.u32 %v63, 4294901760
    %v1257 = vsub.f32 %v63, %v1256
    %v1258 = vand.u32 %v1257, 4294901760
    %v1259 = vsub.f32 %v1257, %v1258
    %v1260 = vand.u32 %v1259, 4294901760
    %1261 = vmatpush.msra.mxu0 %v1260
    %v1262 = vand.u32 %v62, 4294901760
    %v1263 = vsub.f32 %v62, %v1262
    %v1264 = vand.u32 %v1263, 4294901760
    %v1265 = vsub.f32 %v1263, %v1264
    %v1266 = vand.u32 %v1265, 4294901760
    %1267 = vmatpush.msra.mxu0 %v1266
    %v1268 = vand.u32 %v61, 4294901760
    %v1269 = vsub.f32 %v61, %v1268
    %v1270 = vand.u32 %v1269, 4294901760
    %v1271 = vsub.f32 %v1269, %v1270
    %v1272 = vand.u32 %v1271, 4294901760
    %1273 = vmatpush.msra.mxu0 %v1272
    %v1274 = vand.u32 %v60, 4294901760
    %v1275 = vsub.f32 %v60, %v1274
    %v1276 = vand.u32 %v1275, 4294901760
    %v1277 = vsub.f32 %v1275, %v1276
    %v1278 = vand.u32 %v1277, 4294901760
    %1279 = vmatpush.msra.mxu0 %v1278
    %v1280 = vand.u32 %v59, 4294901760
    %v1281 = vsub.f32 %v59, %v1280
    %v1282 = vand.u32 %v1281, 4294901760
    %v1283 = vsub.f32 %v1281, %v1282
    %v1284 = vand.u32 %v1283, 4294901760
    %1285 = vmatpush.msra.mxu0 %v1284
    %v1286 = vand.u32 %v58, 4294901760
    %v1287 = vsub.f32 %v58, %v1286
    %v1288 = vand.u32 %v1287, 4294901760
    %v1289 = vsub.f32 %v1287, %v1288
    %v1290 = vand.u32 %v1289, 4294901760
    %1291 = vmatpush.msra.mxu0 %v1290
    %v1292 = vand.u32 %v57, 4294901760
    %v1293 = vsub.f32 %v57, %v1292
    %v1294 = vand.u32 %v1293, 4294901760
    %v1295 = vsub.f32 %v1293, %v1294
    %v1296 = vand.u32 %v1295, 4294901760
    %1297 = vmatpush.msra.mxu0 %v1296
    %v1298 = vand.u32 %v56, 4294901760
    %v1299 = vsub.f32 %v56, %v1298
    %v1300 = vand.u32 %v1299, 4294901760
    %v1301 = vsub.f32 %v1299, %v1300
    %v1302 = vand.u32 %v1301, 4294901760
    %1303 = vmatpush.msra.mxu0 %v1302
    %v1304 = vand.u32 %v55, 4294901760
    %v1305 = vsub.f32 %v55, %v1304
    %v1306 = vand.u32 %v1305, 4294901760
    %v1307 = vsub.f32 %v1305, %v1306
    %v1308 = vand.u32 %v1307, 4294901760
    %1309 = vmatpush.msra.mxu0 %v1308
    %v1310 = vand.u32 %v54, 4294901760
    %v1311 = vsub.f32 %v54, %v1310
    %v1312 = vand.u32 %v1311, 4294901760
    %v1313 = vsub.f32 %v1311, %v1312
    %v1314 = vand.u32 %v1313, 4294901760
    %1315 = vmatpush.msra.mxu0 %v1314
    %v1316 = vand.u32 %v53, 4294901760
    %v1317 = vsub.f32 %v53, %v1316
    %v1318 = vand.u32 %v1317, 4294901760
    %v1319 = vsub.f32 %v1317, %v1318
    %v1320 = vand.u32 %v1319, 4294901760
    %1321 = vmatpush.msra.mxu0 %v1320
    %v1322 = vand.u32 %v52, 4294901760
    %v1323 = vsub.f32 %v52, %v1322
    %v1324 = vand.u32 %v1323, 4294901760
    %v1325 = vsub.f32 %v1323, %v1324
    %v1326 = vand.u32 %v1325, 4294901760
    %1327 = vmatpush.msra.mxu0 %v1326
    %v1328 = vand.u32 %v51, 4294901760
    %v1329 = vsub.f32 %v51, %v1328
    %v1330 = vand.u32 %v1329, 4294901760
    %v1331 = vsub.f32 %v1329, %v1330
    %v1332 = vand.u32 %v1331, 4294901760
    %1333 = vmatpush.msra.mxu0 %v1332
    %v1334 = vand.u32 %v50, 4294901760
    %v1335 = vsub.f32 %v50, %v1334
    %v1336 = vand.u32 %v1335, 4294901760
    %v1337 = vsub.f32 %v1335, %v1336
    %v1338 = vand.u32 %v1337, 4294901760
    %1339 = vmatpush.msra.mxu0 %v1338
    %v1340 = vand.u32 %v49, 4294901760
    %v1341 = vsub.f32 %v49, %v1340
    %v1342 = vand.u32 %v1341, 4294901760
    %v1343 = vsub.f32 %v1341, %v1342
    %v1344 = vand.u32 %v1343, 4294901760
    %1345 = vmatpush.msra.mxu0 %v1344
    %v1346 = vand.u32 %v48, 4294901760
    %v1347 = vsub.f32 %v48, %v1346
    %v1348 = vand.u32 %v1347, 4294901760
    %v1349 = vsub.f32 %v1347, %v1348
    %v1350 = vand.u32 %v1349, 4294901760
    %1351 = vmatpush.msra.mxu0 %v1350
    %v1352 = vand.u32 %v1204, 4294901760
    %1353 = vmatmul.f32.gmra.mxu0 %v1352
    %v1354 = vpop.f32.mrf.mxu0
    %v1355 = vadd.f32 %v1246, %v1354
    %v1356 = vand.u32 %v1206, 4294901760
    %1357 = vmatmul.f32.gmra.mxu0 %v1356
    %v1358 = vpop.f32.mrf.mxu0
    %v1359 = vadd.f32 %v1254, %v1358
    %1360 = vdwg.mxu0
    %v1361 = vand.u32 %v63, 4294901760
    %v1362 = vsub.f32 %v63, %v1361
    %1363 = vmatpush.msra.mxu0 %v1362
    %v1364 = vand.u32 %v62, 4294901760
    %v1365 = vsub.f32 %v62, %v1364
    %1366 = vmatpush.msra.mxu0 %v1365
    %v1367 = vand.u32 %v61, 4294901760
    %v1368 = vsub.f32 %v61, %v1367
    %1369 = vmatpush.msra.mxu0 %v1368
    %v1370 = vand.u32 %v60, 4294901760
    %v1371 = vsub.f32 %v60, %v1370
    %1372 = vmatpush.msra.mxu0 %v1371
    %v1373 = vand.u32 %v59, 4294901760
    %v1374 = vsub.f32 %v59, %v1373
    %1375 = vmatpush.msra.mxu0 %v1374
    %v1376 = vand.u32 %v58, 4294901760
    %v1377 = vsub.f32 %v58, %v1376
    %1378 = vmatpush.msra.mxu0 %v1377
    %v1379 = vand.u32 %v57, 4294901760
    %v1380 = vsub.f32 %v57, %v1379
    %1381 = vmatpush.msra.mxu0 %v1380
    %v1382 = vand.u32 %v56, 4294901760
    %v1383 = vsub.f32 %v56, %v1382
    %1384 = vmatpush.msra.mxu0 %v1383
    %v1385 = vand.u32 %v55, 4294901760
    %v1386 = vsub.f32 %v55, %v1385
    %1387 = vmatpush.msra.mxu0 %v1386
    %v1388 = vand.u32 %v54, 4294901760
    %v1389 = vsub.f32 %v54, %v1388
    %1390 = vmatpush.msra.mxu0 %v1389
    %v1391 = vand.u32 %v53, 4294901760
    %v1392 = vsub.f32 %v53, %v1391
    %1393 = vmatpush.msra.mxu0 %v1392
    %v1394 = vand.u32 %v52, 4294901760
    %v1395 = vsub.f32 %v52, %v1394
    %1396 = vmatpush.msra.mxu0 %v1395
    %v1397 = vand.u32 %v51, 4294901760
    %v1398 = vsub.f32 %v51, %v1397
    %1399 = vmatpush.msra.mxu0 %v1398
    %v1400 = vand.u32 %v50, 4294901760
    %v1401 = vsub.f32 %v50, %v1400
    %1402 = vmatpush.msra.mxu0 %v1401
    %v1403 = vand.u32 %v49, 4294901760
    %v1404 = vsub.f32 %v49, %v1403
    %1405 = vmatpush.msra.mxu0 %v1404
    %v1406 = vand.u32 %v48, 4294901760
    %v1407 = vsub.f32 %v48, %v1406
    %1408 = vmatpush.msra.mxu0 %v1407
    %v1409 = vand.u32 %v1204, 4294901760
    %v1410 = vsub.f32 %v1204, %v1409
    %1411 = vmatmul.f32.gmra.mxu0 %v1410
    %v1412 = vpop.f32.mrf.mxu0
    %v1413 = vadd.f32 %v1355, %v1412
    %v1414 = vand.u32 %v1206, 4294901760
    %v1415 = vsub.f32 %v1206, %v1414
    %1416 = vmatmul.f32.gmra.mxu0 %v1415
    %v1417 = vpop.f32.mrf.mxu0
    %v1418 = vadd.f32 %v1359, %v1417
    %1419 = vdwg.mxu0
    %v1420 = vand.u32 %v63, 4294901760
    %1421 = vmatpush.msra.mxu0 %v1420
    %v1422 = vand.u32 %v62, 4294901760
    %1423 = vmatpush.msra.mxu0 %v1422
    %v1424 = vand.u32 %v61, 4294901760
    %1425 = vmatpush.msra.mxu0 %v1424
    %v1426 = vand.u32 %v60, 4294901760
    %1427 = vmatpush.msra.mxu0 %v1426
    %v1428 = vand.u32 %v59, 4294901760
    %1429 = vmatpush.msra.mxu0 %v1428
    %v1430 = vand.u32 %v58, 4294901760
    %1431 = vmatpush.msra.mxu0 %v1430
    %v1432 = vand.u32 %v57, 4294901760
    %1433 = vmatpush.msra.mxu0 %v1432
    %v1434 = vand.u32 %v56, 4294901760
    %1435 = vmatpush.msra.mxu0 %v1434
    %v1436 = vand.u32 %v55, 4294901760
    %1437 = vmatpush.msra.mxu0 %v1436
    %v1438 = vand.u32 %v54, 4294901760
    %1439 = vmatpush.msra.mxu0 %v1438
    %v1440 = vand.u32 %v53, 4294901760
    %1441 = vmatpush.msra.mxu0 %v1440
    %v1442 = vand.u32 %v52, 4294901760
    %1443 = vmatpush.msra.mxu0 %v1442
    %v1444 = vand.u32 %v51, 4294901760
    %1445 = vmatpush.msra.mxu0 %v1444
    %v1446 = vand.u32 %v50, 4294901760
    %1447 = vmatpush.msra.mxu0 %v1446
    %v1448 = vand.u32 %v49, 4294901760
    %1449 = vmatpush.msra.mxu0 %v1448
    %v1450 = vand.u32 %v48, 4294901760
    %1451 = vmatpush.msra.mxu0 %v1450
    %v1452 = vand.u32 %v1204, 4294901760
    %v1453 = vsub.f32 %v1204, %v1452
    %v1454 = vand.u32 %v1453, 4294901760
    %1455 = vmatmul.f32.gmra.mxu0 %v1454
    %v1456 = vpop.f32.mrf.mxu0
    %v1457 = vadd.f32 %v1413, %v1456
    %v1458 = vand.u32 %v1206, 4294901760
    %v1459 = vsub.f32 %v1206, %v1458
    %v1460 = vand.u32 %v1459, 4294901760
    %1461 = vmatmul.f32.gmra.mxu0 %v1460
    %v1462 = vpop.f32.mrf.mxu0
    %v1463 = vadd.f32 %v1418, %v1462
    %1464 = vdwg.mxu0
    %v1465 = vand.u32 %v63, 4294901760
    %v1466 = vsub.f32 %v63, %v1465
    %v1467 = vand.u32 %v1466, 4294901760
    %1468 = vmatpush.msra.mxu0 %v1467
    %v1469 = vand.u32 %v62, 4294901760
    %v1470 = vsub.f32 %v62, %v1469
    %v1471 = vand.u32 %v1470, 4294901760
    %1472 = vmatpush.msra.mxu0 %v1471
    %v1473 = vand.u32 %v61, 4294901760
    %v1474 = vsub.f32 %v61, %v1473
    %v1475 = vand.u32 %v1474, 4294901760
    %1476 = vmatpush.msra.mxu0 %v1475
    %v1477 = vand.u32 %v60, 4294901760
    %v1478 = vsub.f32 %v60, %v1477
    %v1479 = vand.u32 %v1478, 4294901760
    %1480 = vmatpush.msra.mxu0 %v1479
    %v1481 = vand.u32 %v59, 4294901760
    %v1482 = vsub.f32 %v59, %v1481
    %v1483 = vand.u32 %v1482, 4294901760
    %1484 = vmatpush.msra.mxu0 %v1483
    %v1485 = vand.u32 %v58, 4294901760
    %v1486 = vsub.f32 %v58, %v1485
    %v1487 = vand.u32 %v1486, 4294901760
    %1488 = vmatpush.msra.mxu0 %v1487
    %v1489 = vand.u32 %v57, 4294901760
    %v1490 = vsub.f32 %v57, %v1489
    %v1491 = vand.u32 %v1490, 4294901760
    %1492 = vmatpush.msra.mxu0 %v1491
    %v1493 = vand.u32 %v56, 4294901760
    %v1494 = vsub.f32 %v56, %v1493
    %v1495 = vand.u32 %v1494, 4294901760
    %1496 = vmatpush.msra.mxu0 %v1495
    %v1497 = vand.u32 %v55, 4294901760
    %v1498 = vsub.f32 %v55, %v1497
    %v1499 = vand.u32 %v1498, 4294901760
    %1500 = vmatpush.msra.mxu0 %v1499
    %v1501 = vand.u32 %v54, 4294901760
    %v1502 = vsub.f32 %v54, %v1501
    %v1503 = vand.u32 %v1502, 4294901760
    %1504 = vmatpush.msra.mxu0 %v1503
    %v1505 = vand.u32 %v53, 4294901760
    %v1506 = vsub.f32 %v53, %v1505
    %v1507 = vand.u32 %v1506, 4294901760
    %1508 = vmatpush.msra.mxu0 %v1507
    %v1509 = vand.u32 %v52, 4294901760
    %v1510 = vsub.f32 %v52, %v1509
    %v1511 = vand.u32 %v1510, 4294901760
    %1512 = vmatpush.msra.mxu0 %v1511
    %v1513 = vand.u32 %v51, 4294901760
    %v1514 = vsub.f32 %v51, %v1513
    %v1515 = vand.u32 %v1514, 4294901760
    %1516 = vmatpush.msra.mxu0 %v1515
    %v1517 = vand.u32 %v50, 4294901760
    %v1518 = vsub.f32 %v50, %v1517
    %v1519 = vand.u32 %v1518, 4294901760
    %1520 = vmatpush.msra.mxu0 %v1519
    %v1521 = vand.u32 %v49, 4294901760
    %v1522 = vsub.f32 %v49, %v1521
    %v1523 = vand.u32 %v1522, 4294901760
    %1524 = vmatpush.msra.mxu0 %v1523
    %v1525 = vand.u32 %v48, 4294901760
    %v1526 = vsub.f32 %v48, %v1525
    %v1527 = vand.u32 %v1526, 4294901760
    %1528 = vmatpush.msra.mxu0 %v1527
    %v1529 = vand.u32 %v1204, 4294901760
    %1530 = vmatmul.f32.gmra.mxu0 %v1529
    %v1531 = vpop.f32.mrf.mxu0
    %v1532 = vadd.f32 %v1457, %v1531
    %v1533 = vand.u32 %v1206, 4294901760
    %1534 = vmatmul.f32.gmra.mxu0 %v1533
    %v1535 = vpop.f32.mrf.mxu0
    %v1536 = vadd.f32 %v1463, %v1535
    %1537 = vdwg.mxu0
    %v1538 = vand.u32 %v63, 4294901760
    %1539 = vmatpush.msra.mxu0 %v1538
    %v1540 = vand.u32 %v62, 4294901760
    %1541 = vmatpush.msra.mxu0 %v1540
    %v1542 = vand.u32 %v61, 4294901760
    %1543 = vmatpush.msra.mxu0 %v1542
    %v1544 = vand.u32 %v60, 4294901760
    %1545 = vmatpush.msra.mxu0 %v1544
    %v1546 = vand.u32 %v59, 4294901760
    %1547 = vmatpush.msra.mxu0 %v1546
    %v1548 = vand.u32 %v58, 4294901760
    %1549 = vmatpush.msra.mxu0 %v1548
    %v1550 = vand.u32 %v57, 4294901760
    %1551 = vmatpush.msra.mxu0 %v1550
    %v1552 = vand.u32 %v56, 4294901760
    %1553 = vmatpush.msra.mxu0 %v1552
    %v1554 = vand.u32 %v55, 4294901760
    %1555 = vmatpush.msra.mxu0 %v1554
    %v1556 = vand.u32 %v54, 4294901760
    %1557 = vmatpush.msra.mxu0 %v1556
    %v1558 = vand.u32 %v53, 4294901760
    %1559 = vmatpush.msra.mxu0 %v1558
    %v1560 = vand.u32 %v52, 4294901760
    %1561 = vmatpush.msra.mxu0 %v1560
    %v1562 = vand.u32 %v51, 4294901760
    %1563 = vmatpush.msra.mxu0 %v1562
    %v1564 = vand.u32 %v50, 4294901760
    %1565 = vmatpush.msra.mxu0 %v1564
    %v1566 = vand.u32 %v49, 4294901760
    %1567 = vmatpush.msra.mxu0 %v1566
    %v1568 = vand.u32 %v48, 4294901760
    %1569 = vmatpush.msra.mxu0 %v1568
    %v1570 = vand.u32 %v1204, 4294901760
    %1571 = vmatmul.f32.gmra.mxu0 %v1570
    %v1572 = vpop.f32.mrf.mxu0
    %v1573 = vadd.f32 %v1532, %v1572
    %v1574 = vand.u32 %v1206, 4294901760
    %1575 = vmatmul.f32.gmra.mxu0 %v1574
    %v1576 = vpop.f32.mrf.mxu0
    %v1577 = vadd.f32 %v1536, %v1576
    %1578 = vdwg.mxu0
    %v1579 = vmax.f32 %v1573, 1e-30
    %v1580 = vmax.f32 %v1577, 1e-30
    %v1581 = vand.u32 %v764, 4294901760
    %1582 = vmatpush.msra.mxu0 %v1581
    %v1583 = vand.u32 %v763, 4294901760
    %1584 = vmatpush.msra.mxu0 %v1583
    %v1585 = vand.u32 %v762, 4294901760
    %1586 = vmatpush.msra.mxu0 %v1585
    %v1587 = vand.u32 %v761, 4294901760
    %1588 = vmatpush.msra.mxu0 %v1587
    %v1589 = vand.u32 %v760, 4294901760
    %1590 = vmatpush.msra.mxu0 %v1589
    %v1591 = vand.u32 %v759, 4294901760
    %1592 = vmatpush.msra.mxu0 %v1591
    %v1593 = vand.u32 %v758, 4294901760
    %1594 = vmatpush.msra.mxu0 %v1593
    %v1595 = vand.u32 %v757, 4294901760
    %1596 = vmatpush.msra.mxu0 %v1595
    %v1597 = vand.u32 %v756, 4294901760
    %1598 = vmatpush.msra.mxu0 %v1597
    %v1599 = vand.u32 %v755, 4294901760
    %1600 = vmatpush.msra.mxu0 %v1599
    %v1601 = vand.u32 %v754, 4294901760
    %1602 = vmatpush.msra.mxu0 %v1601
    %v1603 = vand.u32 %v753, 4294901760
    %1604 = vmatpush.msra.mxu0 %v1603
    %v1605 = vand.u32 %v752, 4294901760
    %1606 = vmatpush.msra.mxu0 %v1605
    %v1607 = vand.u32 %v751, 4294901760
    %1608 = vmatpush.msra.mxu0 %v1607
    %v1609 = vand.u32 %v750, 4294901760
    %1610 = vmatpush.msra.mxu0 %v1609
    %v1611 = vand.u32 %v749, 4294901760
    %1612 = vmatpush.msra.mxu0 %v1611
    %v1613 = vand.u32 %v1204, 4294901760
    %v1614 = vsub.f32 %v1204, %v1613
    %v1615 = vand.u32 %v1614, 4294901760
    %v1616 = vsub.f32 %v1614, %v1615
    %v1617 = vand.u32 %v1616, 4294901760
    %1618 = vmatmul.f32.gmra.mxu0 %v1617
    %v1619 = vpop.f32.mrf.mxu0
    %v1620 = vadd.f32 0.0, %v1619
    %v1621 = vand.u32 %v1206, 4294901760
    %v1622 = vsub.f32 %v1206, %v1621
    %v1623 = vand.u32 %v1622, 4294901760
    %v1624 = vsub.f32 %v1622, %v1623
    %v1625 = vand.u32 %v1624, 4294901760
    %1626 = vmatmul.f32.gmra.mxu0 %v1625
    %v1627 = vpop.f32.mrf.mxu0
    %v1628 = vadd.f32 0.0, %v1627
    %1629 = vdwg.mxu0
    %v1630 = vand.u32 %v764, 4294901760
    %v1631 = vsub.f32 %v764, %v1630
    %v1632 = vand.u32 %v1631, 4294901760
    %v1633 = vsub.f32 %v1631, %v1632
    %v1634 = vand.u32 %v1633, 4294901760
    %1635 = vmatpush.msra.mxu0 %v1634
    %v1636 = vand.u32 %v763, 4294901760
    %v1637 = vsub.f32 %v763, %v1636
    %v1638 = vand.u32 %v1637, 4294901760
    %v1639 = vsub.f32 %v1637, %v1638
    %v1640 = vand.u32 %v1639, 4294901760
    %1641 = vmatpush.msra.mxu0 %v1640
    %v1642 = vand.u32 %v762, 4294901760
    %v1643 = vsub.f32 %v762, %v1642
    %v1644 = vand.u32 %v1643, 4294901760
    %v1645 = vsub.f32 %v1643, %v1644
    %v1646 = vand.u32 %v1645, 4294901760
    %1647 = vmatpush.msra.mxu0 %v1646
    %v1648 = vand.u32 %v761, 4294901760
    %v1649 = vsub.f32 %v761, %v1648
    %v1650 = vand.u32 %v1649, 4294901760
    %v1651 = vsub.f32 %v1649, %v1650
    %v1652 = vand.u32 %v1651, 4294901760
    %1653 = vmatpush.msra.mxu0 %v1652
    %v1654 = vand.u32 %v760, 4294901760
    %v1655 = vsub.f32 %v760, %v1654
    %v1656 = vand.u32 %v1655, 4294901760
    %v1657 = vsub.f32 %v1655, %v1656
    %v1658 = vand.u32 %v1657, 4294901760
    %1659 = vmatpush.msra.mxu0 %v1658
    %v1660 = vand.u32 %v759, 4294901760
    %v1661 = vsub.f32 %v759, %v1660
    %v1662 = vand.u32 %v1661, 4294901760
    %v1663 = vsub.f32 %v1661, %v1662
    %v1664 = vand.u32 %v1663, 4294901760
    %1665 = vmatpush.msra.mxu0 %v1664
    %v1666 = vand.u32 %v758, 4294901760
    %v1667 = vsub.f32 %v758, %v1666
    %v1668 = vand.u32 %v1667, 4294901760
    %v1669 = vsub.f32 %v1667, %v1668
    %v1670 = vand.u32 %v1669, 4294901760
    %1671 = vmatpush.msra.mxu0 %v1670
    %v1672 = vand.u32 %v757, 4294901760
    %v1673 = vsub.f32 %v757, %v1672
    %v1674 = vand.u32 %v1673, 4294901760
    %v1675 = vsub.f32 %v1673, %v1674
    %v1676 = vand.u32 %v1675, 4294901760
    %1677 = vmatpush.msra.mxu0 %v1676
    %v1678 = vand.u32 %v756, 4294901760
    %v1679 = vsub.f32 %v756, %v1678
    %v1680 = vand.u32 %v1679, 4294901760
    %v1681 = vsub.f32 %v1679, %v1680
    %v1682 = vand.u32 %v1681, 4294901760
    %1683 = vmatpush.msra.mxu0 %v1682
    %v1684 = vand.u32 %v755, 4294901760
    %v1685 = vsub.f32 %v755, %v1684
    %v1686 = vand.u32 %v1685, 4294901760
    %v1687 = vsub.f32 %v1685, %v1686
    %v1688 = vand.u32 %v1687, 4294901760
    %1689 = vmatpush.msra.mxu0 %v1688
    %v1690 = vand.u32 %v754, 4294901760
    %v1691 = vsub.f32 %v754, %v1690
    %v1692 = vand.u32 %v1691, 4294901760
    %v1693 = vsub.f32 %v1691, %v1692
    %v1694 = vand.u32 %v1693, 4294901760
    %1695 = vmatpush.msra.mxu0 %v1694
    %v1696 = vand.u32 %v753, 4294901760
    %v1697 = vsub.f32 %v753, %v1696
    %v1698 = vand.u32 %v1697, 4294901760
    %v1699 = vsub.f32 %v1697, %v1698
    %v1700 = vand.u32 %v1699, 4294901760
    %1701 = vmatpush.msra.mxu0 %v1700
    %v1702 = vand.u32 %v752, 4294901760
    %v1703 = vsub.f32 %v752, %v1702
    %v1704 = vand.u32 %v1703, 4294901760
    %v1705 = vsub.f32 %v1703, %v1704
    %v1706 = vand.u32 %v1705, 4294901760
    %1707 = vmatpush.msra.mxu0 %v1706
    %v1708 = vand.u32 %v751, 4294901760
    %v1709 = vsub.f32 %v751, %v1708
    %v1710 = vand.u32 %v1709, 4294901760
    %v1711 = vsub.f32 %v1709, %v1710
    %v1712 = vand.u32 %v1711, 4294901760
    %1713 = vmatpush.msra.mxu0 %v1712
    %v1714 = vand.u32 %v750, 4294901760
    %v1715 = vsub.f32 %v750, %v1714
    %v1716 = vand.u32 %v1715, 4294901760
    %v1717 = vsub.f32 %v1715, %v1716
    %v1718 = vand.u32 %v1717, 4294901760
    %1719 = vmatpush.msra.mxu0 %v1718
    %v1720 = vand.u32 %v749, 4294901760
    %v1721 = vsub.f32 %v749, %v1720
    %v1722 = vand.u32 %v1721, 4294901760
    %v1723 = vsub.f32 %v1721, %v1722
    %v1724 = vand.u32 %v1723, 4294901760
    %1725 = vmatpush.msra.mxu0 %v1724
    %v1726 = vand.u32 %v1204, 4294901760
    %1727 = vmatmul.f32.gmra.mxu0 %v1726
    %v1728 = vpop.f32.mrf.mxu0
    %v1729 = vadd.f32 %v1620, %v1728
    %v1730 = vand.u32 %v1206, 4294901760
    %1731 = vmatmul.f32.gmra.mxu0 %v1730
    %v1732 = vpop.f32.mrf.mxu0
    %v1733 = vadd.f32 %v1628, %v1732
    %1734 = vdwg.mxu0
    %v1735 = vand.u32 %v764, 4294901760
    %v1736 = vsub.f32 %v764, %v1735
    %1737 = vmatpush.msra.mxu0 %v1736
    %v1738 = vand.u32 %v763, 4294901760
    %v1739 = vsub.f32 %v763, %v1738
    %1740 = vmatpush.msra.mxu0 %v1739
    %v1741 = vand.u32 %v762, 4294901760
    %v1742 = vsub.f32 %v762, %v1741
    %1743 = vmatpush.msra.mxu0 %v1742
    %v1744 = vand.u32 %v761, 4294901760
    %v1745 = vsub.f32 %v761, %v1744
    %1746 = vmatpush.msra.mxu0 %v1745
    %v1747 = vand.u32 %v760, 4294901760
    %v1748 = vsub.f32 %v760, %v1747
    %1749 = vmatpush.msra.mxu0 %v1748
    %v1750 = vand.u32 %v759, 4294901760
    %v1751 = vsub.f32 %v759, %v1750
    %1752 = vmatpush.msra.mxu0 %v1751
    %v1753 = vand.u32 %v758, 4294901760
    %v1754 = vsub.f32 %v758, %v1753
    %1755 = vmatpush.msra.mxu0 %v1754
    %v1756 = vand.u32 %v757, 4294901760
    %v1757 = vsub.f32 %v757, %v1756
    %1758 = vmatpush.msra.mxu0 %v1757
    %v1759 = vand.u32 %v756, 4294901760
    %v1760 = vsub.f32 %v756, %v1759
    %1761 = vmatpush.msra.mxu0 %v1760
    %v1762 = vand.u32 %v755, 4294901760
    %v1763 = vsub.f32 %v755, %v1762
    %1764 = vmatpush.msra.mxu0 %v1763
    %v1765 = vand.u32 %v754, 4294901760
    %v1766 = vsub.f32 %v754, %v1765
    %1767 = vmatpush.msra.mxu0 %v1766
    %v1768 = vand.u32 %v753, 4294901760
    %v1769 = vsub.f32 %v753, %v1768
    %1770 = vmatpush.msra.mxu0 %v1769
    %v1771 = vand.u32 %v752, 4294901760
    %v1772 = vsub.f32 %v752, %v1771
    %1773 = vmatpush.msra.mxu0 %v1772
    %v1774 = vand.u32 %v751, 4294901760
    %v1775 = vsub.f32 %v751, %v1774
    %1776 = vmatpush.msra.mxu0 %v1775
    %v1777 = vand.u32 %v750, 4294901760
    %v1778 = vsub.f32 %v750, %v1777
    %1779 = vmatpush.msra.mxu0 %v1778
    %v1780 = vand.u32 %v749, 4294901760
    %v1781 = vsub.f32 %v749, %v1780
    %1782 = vmatpush.msra.mxu0 %v1781
    %v1783 = vand.u32 %v1204, 4294901760
    %v1784 = vsub.f32 %v1204, %v1783
    %1785 = vmatmul.f32.gmra.mxu0 %v1784
    %v1786 = vpop.f32.mrf.mxu0
    %v1787 = vadd.f32 %v1729, %v1786
    %v1788 = vand.u32 %v1206, 4294901760
    %v1789 = vsub.f32 %v1206, %v1788
    %1790 = vmatmul.f32.gmra.mxu0 %v1789
    %v1791 = vpop.f32.mrf.mxu0
    %v1792 = vadd.f32 %v1733, %v1791
    %1793 = vdwg.mxu0
    %v1794 = vand.u32 %v764, 4294901760
    %1795 = vmatpush.msra.mxu0 %v1794
    %v1796 = vand.u32 %v763, 4294901760
    %1797 = vmatpush.msra.mxu0 %v1796
    %v1798 = vand.u32 %v762, 4294901760
    %1799 = vmatpush.msra.mxu0 %v1798
    %v1800 = vand.u32 %v761, 4294901760
    %1801 = vmatpush.msra.mxu0 %v1800
    %v1802 = vand.u32 %v760, 4294901760
    %1803 = vmatpush.msra.mxu0 %v1802
    %v1804 = vand.u32 %v759, 4294901760
    %1805 = vmatpush.msra.mxu0 %v1804
    %v1806 = vand.u32 %v758, 4294901760
    %1807 = vmatpush.msra.mxu0 %v1806
    %v1808 = vand.u32 %v757, 4294901760
    %1809 = vmatpush.msra.mxu0 %v1808
    %v1810 = vand.u32 %v756, 4294901760
    %1811 = vmatpush.msra.mxu0 %v1810
    %v1812 = vand.u32 %v755, 4294901760
    %1813 = vmatpush.msra.mxu0 %v1812
    %v1814 = vand.u32 %v754, 4294901760
    %1815 = vmatpush.msra.mxu0 %v1814
    %v1816 = vand.u32 %v753, 4294901760
    %1817 = vmatpush.msra.mxu0 %v1816
    %v1818 = vand.u32 %v752, 4294901760
    %1819 = vmatpush.msra.mxu0 %v1818
    %v1820 = vand.u32 %v751, 4294901760
    %1821 = vmatpush.msra.mxu0 %v1820
    %v1822 = vand.u32 %v750, 4294901760
    %1823 = vmatpush.msra.mxu0 %v1822
    %v1824 = vand.u32 %v749, 4294901760
    %1825 = vmatpush.msra.mxu0 %v1824
    %v1826 = vand.u32 %v1204, 4294901760
    %v1827 = vsub.f32 %v1204, %v1826
    %v1828 = vand.u32 %v1827, 4294901760
    %1829 = vmatmul.f32.gmra.mxu0 %v1828
    %v1830 = vpop.f32.mrf.mxu0
    %v1831 = vadd.f32 %v1787, %v1830
    %v1832 = vand.u32 %v1206, 4294901760
    %v1833 = vsub.f32 %v1206, %v1832
    %v1834 = vand.u32 %v1833, 4294901760
    %1835 = vmatmul.f32.gmra.mxu0 %v1834
    %v1836 = vpop.f32.mrf.mxu0
    %v1837 = vadd.f32 %v1792, %v1836
    %1838 = vdwg.mxu0
    %v1839 = vand.u32 %v764, 4294901760
    %v1840 = vsub.f32 %v764, %v1839
    %v1841 = vand.u32 %v1840, 4294901760
    %1842 = vmatpush.msra.mxu0 %v1841
    %v1843 = vand.u32 %v763, 4294901760
    %v1844 = vsub.f32 %v763, %v1843
    %v1845 = vand.u32 %v1844, 4294901760
    %1846 = vmatpush.msra.mxu0 %v1845
    %v1847 = vand.u32 %v762, 4294901760
    %v1848 = vsub.f32 %v762, %v1847
    %v1849 = vand.u32 %v1848, 4294901760
    %1850 = vmatpush.msra.mxu0 %v1849
    %v1851 = vand.u32 %v761, 4294901760
    %v1852 = vsub.f32 %v761, %v1851
    %v1853 = vand.u32 %v1852, 4294901760
    %1854 = vmatpush.msra.mxu0 %v1853
    %v1855 = vand.u32 %v760, 4294901760
    %v1856 = vsub.f32 %v760, %v1855
    %v1857 = vand.u32 %v1856, 4294901760
    %1858 = vmatpush.msra.mxu0 %v1857
    %v1859 = vand.u32 %v759, 4294901760
    %v1860 = vsub.f32 %v759, %v1859
    %v1861 = vand.u32 %v1860, 4294901760
    %1862 = vmatpush.msra.mxu0 %v1861
    %v1863 = vand.u32 %v758, 4294901760
    %v1864 = vsub.f32 %v758, %v1863
    %v1865 = vand.u32 %v1864, 4294901760
    %1866 = vmatpush.msra.mxu0 %v1865
    %v1867 = vand.u32 %v757, 4294901760
    %v1868 = vsub.f32 %v757, %v1867
    %v1869 = vand.u32 %v1868, 4294901760
    %1870 = vmatpush.msra.mxu0 %v1869
    %v1871 = vand.u32 %v756, 4294901760
    %v1872 = vsub.f32 %v756, %v1871
    %v1873 = vand.u32 %v1872, 4294901760
    %1874 = vmatpush.msra.mxu0 %v1873
    %v1875 = vand.u32 %v755, 4294901760
    %v1876 = vsub.f32 %v755, %v1875
    %v1877 = vand.u32 %v1876, 4294901760
    %1878 = vmatpush.msra.mxu0 %v1877
    %v1879 = vand.u32 %v754, 4294901760
    %v1880 = vsub.f32 %v754, %v1879
    %v1881 = vand.u32 %v1880, 4294901760
    %1882 = vmatpush.msra.mxu0 %v1881
    %v1883 = vand.u32 %v753, 4294901760
    %v1884 = vsub.f32 %v753, %v1883
    %v1885 = vand.u32 %v1884, 4294901760
    %1886 = vmatpush.msra.mxu0 %v1885
    %v1887 = vand.u32 %v752, 4294901760
    %v1888 = vsub.f32 %v752, %v1887
    %v1889 = vand.u32 %v1888, 4294901760
    %1890 = vmatpush.msra.mxu0 %v1889
    %v1891 = vand.u32 %v751, 4294901760
    %v1892 = vsub.f32 %v751, %v1891
    %v1893 = vand.u32 %v1892, 4294901760
    %1894 = vmatpush.msra.mxu0 %v1893
    %v1895 = vand.u32 %v750, 4294901760
    %v1896 = vsub.f32 %v750, %v1895
    %v1897 = vand.u32 %v1896, 4294901760
    %1898 = vmatpush.msra.mxu0 %v1897
    %v1899 = vand.u32 %v749, 4294901760
    %v1900 = vsub.f32 %v749, %v1899
    %v1901 = vand.u32 %v1900, 4294901760
    %1902 = vmatpush.msra.mxu0 %v1901
    %v1903 = vand.u32 %v1204, 4294901760
    %1904 = vmatmul.f32.gmra.mxu0 %v1903
    %v1905 = vpop.f32.mrf.mxu0
    %v1906 = vadd.f32 %v1831, %v1905
    %v1907 = vand.u32 %v1206, 4294901760
    %1908 = vmatmul.f32.gmra.mxu0 %v1907
    %v1909 = vpop.f32.mrf.mxu0
    %v1910 = vadd.f32 %v1837, %v1909
    %1911 = vdwg.mxu0
    %v1912 = vand.u32 %v764, 4294901760
    %1913 = vmatpush.msra.mxu0 %v1912
    %v1914 = vand.u32 %v763, 4294901760
    %1915 = vmatpush.msra.mxu0 %v1914
    %v1916 = vand.u32 %v762, 4294901760
    %1917 = vmatpush.msra.mxu0 %v1916
    %v1918 = vand.u32 %v761, 4294901760
    %1919 = vmatpush.msra.mxu0 %v1918
    %v1920 = vand.u32 %v760, 4294901760
    %1921 = vmatpush.msra.mxu0 %v1920
    %v1922 = vand.u32 %v759, 4294901760
    %1923 = vmatpush.msra.mxu0 %v1922
    %v1924 = vand.u32 %v758, 4294901760
    %1925 = vmatpush.msra.mxu0 %v1924
    %v1926 = vand.u32 %v757, 4294901760
    %1927 = vmatpush.msra.mxu0 %v1926
    %v1928 = vand.u32 %v756, 4294901760
    %1929 = vmatpush.msra.mxu0 %v1928
    %v1930 = vand.u32 %v755, 4294901760
    %1931 = vmatpush.msra.mxu0 %v1930
    %v1932 = vand.u32 %v754, 4294901760
    %1933 = vmatpush.msra.mxu0 %v1932
    %v1934 = vand.u32 %v753, 4294901760
    %1935 = vmatpush.msra.mxu0 %v1934
    %v1936 = vand.u32 %v752, 4294901760
    %1937 = vmatpush.msra.mxu0 %v1936
    %v1938 = vand.u32 %v751, 4294901760
    %1939 = vmatpush.msra.mxu0 %v1938
    %v1940 = vand.u32 %v750, 4294901760
    %1941 = vmatpush.msra.mxu0 %v1940
    %v1942 = vand.u32 %v749, 4294901760
    %1943 = vmatpush.msra.mxu0 %v1942
    %v1944 = vand.u32 %v1204, 4294901760
    %1945 = vmatmul.f32.gmra.mxu0 %v1944
    %v1946 = vpop.f32.mrf.mxu0
    %v1947 = vadd.f32 %v1906, %v1946
    %v1948 = vand.u32 %v1206, 4294901760
    %1949 = vmatmul.f32.gmra.mxu0 %v1948
    %v1950 = vpop.f32.mrf.mxu0
    %v1951 = vadd.f32 %v1910, %v1950
    %1952 = vdwg.mxu0
    %v1953 = vrcp.pop %v1579
    %v1954 = vmul.f32 %v1579, %v1953
    %v1955 = vsub.f32 1.0, %v1954
    %v1956 = vmul.f32 %v1953, %v1955
    %v1957 = vadd.f32 %v1953, %v1956
    %vm1958 = vweird.f32 %v1579
    %vm1959 = vweird.f32 %v1953
    %vm1960 = vmor %vm1958, %vm1959
    %v1961 = vsel %vm1960, %v1953, %v1957
    %v1962 = vand.u32 2147483647, %v1579
    %vm1963 = vcmp.eq.f32.partialorder %v1962, 8.507059e+37
    %v1964 = vand.u32 %v1579, 2147483648
    %v1965 = vor.u32 1.1754944e-38, %v1964
    %v1966 = vsel %vm1963, %v1965, %v1961
    %v1967 = vmul.f32 %v1947, %v1966
    %v1968 = vrcp.pop %v1580
    %v1969 = vmul.f32 %v1580, %v1968
    %v1970 = vsub.f32 1.0, %v1969
    %v1971 = vmul.f32 %v1968, %v1970
    %v1972 = vadd.f32 %v1968, %v1971
    %vm1973 = vweird.f32 %v1580
    %vm1974 = vweird.f32 %v1968
    %vm1975 = vmor %vm1973, %vm1974
    %v1976 = vsel %vm1975, %v1968, %v1972
    %v1977 = vand.u32 2147483647, %v1580
    %vm1978 = vcmp.eq.f32.partialorder %v1977, 8.507059e+37
    %v1979 = vand.u32 %v1580, 2147483648
    %v1980 = vor.u32 1.1754944e-38, %v1979
    %v1981 = vsel %vm1978, %v1980, %v1976
    %v1982 = vmul.f32 %v1951, %v1981
    %1983 = vmatpush.msra.mxu0 0.0
    %1984 = vmatpush.msra.mxu0 0.0
    %1985 = vmatpush.msra.mxu0 0.0
    %1986 = vmatpush.msra.mxu0 0.0
    %1987 = vmatpush.msra.mxu0 0.0
    %1988 = vmatpush.msra.mxu0 0.0
    %1989 = vmatpush.msra.mxu0 0.0
    %1990 = vmatpush.msra.mxu0 0.0
    %1991 = vmatpush.msra.mxu0 0.0
    %1992 = vmatpush.msra.mxu0 0.0
    %1993 = vmatpush.msra.mxu0 0.0
    %1994 = vmatpush.msra.mxu0 0.0
    %v1995 = vand.u32 %v43, 4294901760
    %1996 = vmatpush.msra.mxu0 %v1995
    %v1997 = vand.u32 %v42, 4294901760
    %1998 = vmatpush.msra.mxu0 %v1997
    %v1999 = vand.u32 %v41, 4294901760
    %2000 = vmatpush.msra.mxu0 %v1999
    %v2001 = vand.u32 %v40, 4294901760
    %2002 = vmatpush.msra.mxu0 %v2001
    %v2003 = vand.u32 %v766, 4294901760
    %v2004 = vsub.f32 %v766, %v2003
    %v2005 = vand.u32 %v2004, 4294901760
    %v2006 = vsub.f32 %v2004, %v2005
    %v2007 = vand.u32 %v2006, 4294901760
    %2008 = vmatmul.f32.gmra.mxu0 %v2007
    %v2009 = vpop.f32.mrf.mxu0
    %v2010 = vadd.f32 0.0, %v2009
    %v2011 = vand.u32 %v769, 4294901760
    %v2012 = vsub.f32 %v769, %v2011
    %v2013 = vand.u32 %v2012, 4294901760
    %v2014 = vsub.f32 %v2012, %v2013
    %v2015 = vand.u32 %v2014, 4294901760
    %2016 = vmatmul.f32.gmra.mxu0 %v2015
    %v2017 = vpop.f32.mrf.mxu0
    %v2018 = vadd.f32 0.0, %v2017
    %2019 = vdwg.mxu0
    %2020 = vmatpush.msra.mxu0 0.0
    %2021 = vmatpush.msra.mxu0 0.0
    %2022 = vmatpush.msra.mxu0 0.0
    %2023 = vmatpush.msra.mxu0 0.0
    %2024 = vmatpush.msra.mxu0 0.0
    %2025 = vmatpush.msra.mxu0 0.0
    %2026 = vmatpush.msra.mxu0 0.0
    %2027 = vmatpush.msra.mxu0 0.0
    %2028 = vmatpush.msra.mxu0 0.0
    %2029 = vmatpush.msra.mxu0 0.0
    %2030 = vmatpush.msra.mxu0 0.0
    %2031 = vmatpush.msra.mxu0 0.0
    %v2032 = vand.u32 %v43, 4294901760
    %v2033 = vsub.f32 %v43, %v2032
    %v2034 = vand.u32 %v2033, 4294901760
    %v2035 = vsub.f32 %v2033, %v2034
    %v2036 = vand.u32 %v2035, 4294901760
    %2037 = vmatpush.msra.mxu0 %v2036
    %v2038 = vand.u32 %v42, 4294901760
    %v2039 = vsub.f32 %v42, %v2038
    %v2040 = vand.u32 %v2039, 4294901760
    %v2041 = vsub.f32 %v2039, %v2040
    %v2042 = vand.u32 %v2041, 4294901760
    %2043 = vmatpush.msra.mxu0 %v2042
    %v2044 = vand.u32 %v41, 4294901760
    %v2045 = vsub.f32 %v41, %v2044
    %v2046 = vand.u32 %v2045, 4294901760
    %v2047 = vsub.f32 %v2045, %v2046
    %v2048 = vand.u32 %v2047, 4294901760
    %2049 = vmatpush.msra.mxu0 %v2048
    %v2050 = vand.u32 %v40, 4294901760
    %v2051 = vsub.f32 %v40, %v2050
    %v2052 = vand.u32 %v2051, 4294901760
    %v2053 = vsub.f32 %v2051, %v2052
    %v2054 = vand.u32 %v2053, 4294901760
    %2055 = vmatpush.msra.mxu0 %v2054
    %v2056 = vand.u32 %v766, 4294901760
    %2057 = vmatmul.f32.gmra.mxu0 %v2056
    %v2058 = vpop.f32.mrf.mxu0
    %v2059 = vadd.f32 %v2010, %v2058
    %v2060 = vand.u32 %v769, 4294901760
    %2061 = vmatmul.f32.gmra.mxu0 %v2060
    %v2062 = vpop.f32.mrf.mxu0
    %v2063 = vadd.f32 %v2018, %v2062
    %2064 = vdwg.mxu0
    %2065 = vmatpush.msra.mxu0 0.0
    %2066 = vmatpush.msra.mxu0 0.0
    %2067 = vmatpush.msra.mxu0 0.0
    %2068 = vmatpush.msra.mxu0 0.0
    %2069 = vmatpush.msra.mxu0 0.0
    %2070 = vmatpush.msra.mxu0 0.0
    %2071 = vmatpush.msra.mxu0 0.0
    %2072 = vmatpush.msra.mxu0 0.0
    %2073 = vmatpush.msra.mxu0 0.0
    %2074 = vmatpush.msra.mxu0 0.0
    %2075 = vmatpush.msra.mxu0 0.0
    %2076 = vmatpush.msra.mxu0 0.0
    %v2077 = vand.u32 %v43, 4294901760
    %v2078 = vsub.f32 %v43, %v2077
    %2079 = vmatpush.msra.mxu0 %v2078
    %v2080 = vand.u32 %v42, 4294901760
    %v2081 = vsub.f32 %v42, %v2080
    %2082 = vmatpush.msra.mxu0 %v2081
    %v2083 = vand.u32 %v41, 4294901760
    %v2084 = vsub.f32 %v41, %v2083
    %2085 = vmatpush.msra.mxu0 %v2084
    %v2086 = vand.u32 %v40, 4294901760
    %v2087 = vsub.f32 %v40, %v2086
    %2088 = vmatpush.msra.mxu0 %v2087
    %v2089 = vand.u32 %v766, 4294901760
    %v2090 = vsub.f32 %v766, %v2089
    %2091 = vmatmul.f32.gmra.mxu0 %v2090
    %v2092 = vpop.f32.mrf.mxu0
    %v2093 = vadd.f32 %v2059, %v2092
    %v2094 = vand.u32 %v769, 4294901760
    %v2095 = vsub.f32 %v769, %v2094
    %2096 = vmatmul.f32.gmra.mxu0 %v2095
    %v2097 = vpop.f32.mrf.mxu0
    %v2098 = vadd.f32 %v2063, %v2097
    %2099 = vdwg.mxu0
    %2100 = vmatpush.msra.mxu0 0.0
    %2101 = vmatpush.msra.mxu0 0.0
    %2102 = vmatpush.msra.mxu0 0.0
    %2103 = vmatpush.msra.mxu0 0.0
    %2104 = vmatpush.msra.mxu0 0.0
    %2105 = vmatpush.msra.mxu0 0.0
    %2106 = vmatpush.msra.mxu0 0.0
    %2107 = vmatpush.msra.mxu0 0.0
    %2108 = vmatpush.msra.mxu0 0.0
    %2109 = vmatpush.msra.mxu0 0.0
    %2110 = vmatpush.msra.mxu0 0.0
    %2111 = vmatpush.msra.mxu0 0.0
    %v2112 = vand.u32 %v43, 4294901760
    %2113 = vmatpush.msra.mxu0 %v2112
    %v2114 = vand.u32 %v42, 4294901760
    %2115 = vmatpush.msra.mxu0 %v2114
    %v2116 = vand.u32 %v41, 4294901760
    %2117 = vmatpush.msra.mxu0 %v2116
    %v2118 = vand.u32 %v40, 4294901760
    %2119 = vmatpush.msra.mxu0 %v2118
    %v2120 = vand.u32 %v766, 4294901760
    %v2121 = vsub.f32 %v766, %v2120
    %v2122 = vand.u32 %v2121, 4294901760
    %2123 = vmatmul.f32.gmra.mxu0 %v2122
    %v2124 = vpop.f32.mrf.mxu0
    %v2125 = vadd.f32 %v2093, %v2124
    %v2126 = vand.u32 %v769, 4294901760
    %v2127 = vsub.f32 %v769, %v2126
    %v2128 = vand.u32 %v2127, 4294901760
    %2129 = vmatmul.f32.gmra.mxu0 %v2128
    %v2130 = vpop.f32.mrf.mxu0
    %v2131 = vadd.f32 %v2098, %v2130
    %2132 = vdwg.mxu0
    %2133 = vmatpush.msra.mxu0 0.0
    %2134 = vmatpush.msra.mxu0 0.0
    %2135 = vmatpush.msra.mxu0 0.0
    %2136 = vmatpush.msra.mxu0 0.0
    %2137 = vmatpush.msra.mxu0 0.0
    %2138 = vmatpush.msra.mxu0 0.0
    %2139 = vmatpush.msra.mxu0 0.0
    %2140 = vmatpush.msra.mxu0 0.0
    %2141 = vmatpush.msra.mxu0 0.0
    %2142 = vmatpush.msra.mxu0 0.0
    %2143 = vmatpush.msra.mxu0 0.0
    %2144 = vmatpush.msra.mxu0 0.0
    %v2145 = vand.u32 %v43, 4294901760
    %v2146 = vsub.f32 %v43, %v2145
    %v2147 = vand.u32 %v2146, 4294901760
    %2148 = vmatpush.msra.mxu0 %v2147
    %v2149 = vand.u32 %v42, 4294901760
    %v2150 = vsub.f32 %v42, %v2149
    %v2151 = vand.u32 %v2150, 4294901760
    %2152 = vmatpush.msra.mxu0 %v2151
    %v2153 = vand.u32 %v41, 4294901760
    %v2154 = vsub.f32 %v41, %v2153
    %v2155 = vand.u32 %v2154, 4294901760
    %2156 = vmatpush.msra.mxu0 %v2155
    %v2157 = vand.u32 %v40, 4294901760
    %v2158 = vsub.f32 %v40, %v2157
    %v2159 = vand.u32 %v2158, 4294901760
    %2160 = vmatpush.msra.mxu0 %v2159
    %v2161 = vand.u32 %v766, 4294901760
    %2162 = vmatmul.f32.gmra.mxu0 %v2161
    %v2163 = vpop.f32.mrf.mxu0
    %v2164 = vadd.f32 %v2125, %v2163
    %v2165 = vand.u32 %v769, 4294901760
    %2166 = vmatmul.f32.gmra.mxu0 %v2165
    %v2167 = vpop.f32.mrf.mxu0
    %v2168 = vadd.f32 %v2131, %v2167
    %2169 = vdwg.mxu0
    %2170 = vmatpush.msra.mxu0 0.0
    %2171 = vmatpush.msra.mxu0 0.0
    %2172 = vmatpush.msra.mxu0 0.0
    %2173 = vmatpush.msra.mxu0 0.0
    %2174 = vmatpush.msra.mxu0 0.0
    %2175 = vmatpush.msra.mxu0 0.0
    %2176 = vmatpush.msra.mxu0 0.0
    %2177 = vmatpush.msra.mxu0 0.0
    %2178 = vmatpush.msra.mxu0 0.0
    %2179 = vmatpush.msra.mxu0 0.0
    %2180 = vmatpush.msra.mxu0 0.0
    %2181 = vmatpush.msra.mxu0 0.0
    %v2182 = vand.u32 %v43, 4294901760
    %2183 = vmatpush.msra.mxu0 %v2182
    %v2184 = vand.u32 %v42, 4294901760
    %2185 = vmatpush.msra.mxu0 %v2184
    %v2186 = vand.u32 %v41, 4294901760
    %2187 = vmatpush.msra.mxu0 %v2186
    %v2188 = vand.u32 %v40, 4294901760
    %2189 = vmatpush.msra.mxu0 %v2188
    %v2190 = vand.u32 %v766, 4294901760
    %2191 = vmatmul.f32.gmra.mxu0 %v2190
    %v2192 = vpop.f32.mrf.mxu0
    %v2193 = vadd.f32 %v2164, %v2192
    %v2194 = vand.u32 %v769, 4294901760
    %2195 = vmatmul.f32.gmra.mxu0 %v2194
    %v2196 = vpop.f32.mrf.mxu0
    %v2197 = vadd.f32 %v2168, %v2196
    %2198 = vdwg.mxu0
    %v2200 = vsel %vm70, %v1967, 0
    %v2203 = vsel %vm70, %v1982, 0
    %2205 = vmatpush.msra.mxu0 0.0
    %2206 = vmatpush.msra.mxu0 0.0
    %2207 = vmatpush.msra.mxu0 0.0
    %2208 = vmatpush.msra.mxu0 0.0
    %2209 = vmatpush.msra.mxu0 0.0
    %2210 = vmatpush.msra.mxu0 0.0
    %2211 = vmatpush.msra.mxu0 0.0
    %2212 = vmatpush.msra.mxu0 0.0
    %2213 = vmatpush.msra.mxu0 0.0
    %2214 = vmatpush.msra.mxu0 0.0
    %2215 = vmatpush.msra.mxu0 0.0
    %2216 = vmatpush.msra.mxu0 0.0
    %v2217 = vand.u32 %v35, 4294901760
    %2218 = vmatpush.msra.mxu0 %v2217
    %v2219 = vand.u32 %v34, 4294901760
    %2220 = vmatpush.msra.mxu0 %v2219
    %v2221 = vand.u32 %v33, 4294901760
    %2222 = vmatpush.msra.mxu0 %v2221
    %v2223 = vand.u32 %v32, 4294901760
    %2224 = vmatpush.msra.mxu0 %v2223
    %v2225 = vand.u32 %v2200, 4294901760
    %v2226 = vsub.f32 %v2200, %v2225
    %v2227 = vand.u32 %v2226, 4294901760
    %v2228 = vsub.f32 %v2226, %v2227
    %v2229 = vand.u32 %v2228, 4294901760
    %2230 = vmatmul.f32.gmra.mxu0 %v2229
    %v2231 = vpop.f32.mrf.mxu0
    %v2232 = vadd.f32 %v2193, %v2231
    %v2233 = vand.u32 %v2203, 4294901760
    %v2234 = vsub.f32 %v2203, %v2233
    %v2235 = vand.u32 %v2234, 4294901760
    %v2236 = vsub.f32 %v2234, %v2235
    %v2237 = vand.u32 %v2236, 4294901760
    %2238 = vmatmul.f32.gmra.mxu0 %v2237
    %v2239 = vpop.f32.mrf.mxu0
    %v2240 = vadd.f32 %v2197, %v2239
    %2241 = vdwg.mxu0
    %2242 = vmatpush.msra.mxu0 0.0
    %2243 = vmatpush.msra.mxu0 0.0
    %2244 = vmatpush.msra.mxu0 0.0
    %2245 = vmatpush.msra.mxu0 0.0
    %2246 = vmatpush.msra.mxu0 0.0
    %2247 = vmatpush.msra.mxu0 0.0
    %2248 = vmatpush.msra.mxu0 0.0
    %2249 = vmatpush.msra.mxu0 0.0
    %2250 = vmatpush.msra.mxu0 0.0
    %2251 = vmatpush.msra.mxu0 0.0
    %2252 = vmatpush.msra.mxu0 0.0
    %2253 = vmatpush.msra.mxu0 0.0
    %v2254 = vand.u32 %v35, 4294901760
    %v2255 = vsub.f32 %v35, %v2254
    %v2256 = vand.u32 %v2255, 4294901760
    %v2257 = vsub.f32 %v2255, %v2256
    %v2258 = vand.u32 %v2257, 4294901760
    %2259 = vmatpush.msra.mxu0 %v2258
    %v2260 = vand.u32 %v34, 4294901760
    %v2261 = vsub.f32 %v34, %v2260
    %v2262 = vand.u32 %v2261, 4294901760
    %v2263 = vsub.f32 %v2261, %v2262
    %v2264 = vand.u32 %v2263, 4294901760
    %2265 = vmatpush.msra.mxu0 %v2264
    %v2266 = vand.u32 %v33, 4294901760
    %v2267 = vsub.f32 %v33, %v2266
    %v2268 = vand.u32 %v2267, 4294901760
    %v2269 = vsub.f32 %v2267, %v2268
    %v2270 = vand.u32 %v2269, 4294901760
    %2271 = vmatpush.msra.mxu0 %v2270
    %v2272 = vand.u32 %v32, 4294901760
    %v2273 = vsub.f32 %v32, %v2272
    %v2274 = vand.u32 %v2273, 4294901760
    %v2275 = vsub.f32 %v2273, %v2274
    %v2276 = vand.u32 %v2275, 4294901760
    %2277 = vmatpush.msra.mxu0 %v2276
    %v2278 = vand.u32 %v2200, 4294901760
    %2279 = vmatmul.f32.gmra.mxu0 %v2278
    %v2280 = vpop.f32.mrf.mxu0
    %v2281 = vadd.f32 %v2232, %v2280
    %v2282 = vand.u32 %v2203, 4294901760
    %2283 = vmatmul.f32.gmra.mxu0 %v2282
    %v2284 = vpop.f32.mrf.mxu0
    %v2285 = vadd.f32 %v2240, %v2284
    %2286 = vdwg.mxu0
    %2287 = vmatpush.msra.mxu0 0.0
    %2288 = vmatpush.msra.mxu0 0.0
    %2289 = vmatpush.msra.mxu0 0.0
    %2290 = vmatpush.msra.mxu0 0.0
    %2291 = vmatpush.msra.mxu0 0.0
    %2292 = vmatpush.msra.mxu0 0.0
    %2293 = vmatpush.msra.mxu0 0.0
    %2294 = vmatpush.msra.mxu0 0.0
    %2295 = vmatpush.msra.mxu0 0.0
    %2296 = vmatpush.msra.mxu0 0.0
    %2297 = vmatpush.msra.mxu0 0.0
    %2298 = vmatpush.msra.mxu0 0.0
    %v2299 = vand.u32 %v35, 4294901760
    %v2300 = vsub.f32 %v35, %v2299
    %2301 = vmatpush.msra.mxu0 %v2300
    %v2302 = vand.u32 %v34, 4294901760
    %v2303 = vsub.f32 %v34, %v2302
    %2304 = vmatpush.msra.mxu0 %v2303
    %v2305 = vand.u32 %v33, 4294901760
    %v2306 = vsub.f32 %v33, %v2305
    %2307 = vmatpush.msra.mxu0 %v2306
    %v2308 = vand.u32 %v32, 4294901760
    %v2309 = vsub.f32 %v32, %v2308
    %2310 = vmatpush.msra.mxu0 %v2309
    %v2311 = vand.u32 %v2200, 4294901760
    %v2312 = vsub.f32 %v2200, %v2311
    %2313 = vmatmul.f32.gmra.mxu0 %v2312
    %v2314 = vpop.f32.mrf.mxu0
    %v2315 = vadd.f32 %v2281, %v2314
    %v2316 = vand.u32 %v2203, 4294901760
    %v2317 = vsub.f32 %v2203, %v2316
    %2318 = vmatmul.f32.gmra.mxu0 %v2317
    %v2319 = vpop.f32.mrf.mxu0
    %v2320 = vadd.f32 %v2285, %v2319
    %2321 = vdwg.mxu0
    %2322 = vmatpush.msra.mxu0 0.0
    %2323 = vmatpush.msra.mxu0 0.0
    %2324 = vmatpush.msra.mxu0 0.0
    %2325 = vmatpush.msra.mxu0 0.0
    %2326 = vmatpush.msra.mxu0 0.0
    %2327 = vmatpush.msra.mxu0 0.0
    %2328 = vmatpush.msra.mxu0 0.0
    %2329 = vmatpush.msra.mxu0 0.0
    %2330 = vmatpush.msra.mxu0 0.0
    %2331 = vmatpush.msra.mxu0 0.0
    %2332 = vmatpush.msra.mxu0 0.0
    %2333 = vmatpush.msra.mxu0 0.0
    %v2334 = vand.u32 %v35, 4294901760
    %2335 = vmatpush.msra.mxu0 %v2334
    %v2336 = vand.u32 %v34, 4294901760
    %2337 = vmatpush.msra.mxu0 %v2336
    %v2338 = vand.u32 %v33, 4294901760
    %2339 = vmatpush.msra.mxu0 %v2338
    %v2340 = vand.u32 %v32, 4294901760
    %2341 = vmatpush.msra.mxu0 %v2340
    %v2342 = vand.u32 %v2200, 4294901760
    %v2343 = vsub.f32 %v2200, %v2342
    %v2344 = vand.u32 %v2343, 4294901760
    %2345 = vmatmul.f32.gmra.mxu0 %v2344
    %v2346 = vpop.f32.mrf.mxu0
    %v2347 = vadd.f32 %v2315, %v2346
    %v2348 = vand.u32 %v2203, 4294901760
    %v2349 = vsub.f32 %v2203, %v2348
    %v2350 = vand.u32 %v2349, 4294901760
    %2351 = vmatmul.f32.gmra.mxu0 %v2350
    %v2352 = vpop.f32.mrf.mxu0
    %v2353 = vadd.f32 %v2320, %v2352
    %2354 = vdwg.mxu0
    %2355 = vmatpush.msra.mxu0 0.0
    %2356 = vmatpush.msra.mxu0 0.0
    %2357 = vmatpush.msra.mxu0 0.0
    %2358 = vmatpush.msra.mxu0 0.0
    %2359 = vmatpush.msra.mxu0 0.0
    %2360 = vmatpush.msra.mxu0 0.0
    %2361 = vmatpush.msra.mxu0 0.0
    %2362 = vmatpush.msra.mxu0 0.0
    %2363 = vmatpush.msra.mxu0 0.0
    %2364 = vmatpush.msra.mxu0 0.0
    %2365 = vmatpush.msra.mxu0 0.0
    %2366 = vmatpush.msra.mxu0 0.0
    %v2367 = vand.u32 %v35, 4294901760
    %v2368 = vsub.f32 %v35, %v2367
    %v2369 = vand.u32 %v2368, 4294901760
    %2370 = vmatpush.msra.mxu0 %v2369
    %v2371 = vand.u32 %v34, 4294901760
    %v2372 = vsub.f32 %v34, %v2371
    %v2373 = vand.u32 %v2372, 4294901760
    %2374 = vmatpush.msra.mxu0 %v2373
    %v2375 = vand.u32 %v33, 4294901760
    %v2376 = vsub.f32 %v33, %v2375
    %v2377 = vand.u32 %v2376, 4294901760
    %2378 = vmatpush.msra.mxu0 %v2377
    %v2379 = vand.u32 %v32, 4294901760
    %v2380 = vsub.f32 %v32, %v2379
    %v2381 = vand.u32 %v2380, 4294901760
    %2382 = vmatpush.msra.mxu0 %v2381
    %v2383 = vand.u32 %v2200, 4294901760
    %2384 = vmatmul.f32.gmra.mxu0 %v2383
    %v2385 = vpop.f32.mrf.mxu0
    %v2386 = vadd.f32 %v2347, %v2385
    %v2387 = vand.u32 %v2203, 4294901760
    %2388 = vmatmul.f32.gmra.mxu0 %v2387
    %v2389 = vpop.f32.mrf.mxu0
    %v2390 = vadd.f32 %v2353, %v2389
    %2391 = vdwg.mxu0
    %2392 = vmatpush.msra.mxu0 0.0
    %2393 = vmatpush.msra.mxu0 0.0
    %2394 = vmatpush.msra.mxu0 0.0
    %2395 = vmatpush.msra.mxu0 0.0
    %2396 = vmatpush.msra.mxu0 0.0
    %2397 = vmatpush.msra.mxu0 0.0
    %2398 = vmatpush.msra.mxu0 0.0
    %2399 = vmatpush.msra.mxu0 0.0
    %2400 = vmatpush.msra.mxu0 0.0
    %2401 = vmatpush.msra.mxu0 0.0
    %2402 = vmatpush.msra.mxu0 0.0
    %2403 = vmatpush.msra.mxu0 0.0
    %v2404 = vand.u32 %v35, 4294901760
    %2405 = vmatpush.msra.mxu0 %v2404
    %v2406 = vand.u32 %v34, 4294901760
    %2407 = vmatpush.msra.mxu0 %v2406
    %v2408 = vand.u32 %v33, 4294901760
    %2409 = vmatpush.msra.mxu0 %v2408
    %v2410 = vand.u32 %v32, 4294901760
    %2411 = vmatpush.msra.mxu0 %v2410
    %v2412 = vand.u32 %v2200, 4294901760
    %2413 = vmatmul.f32.gmra.mxu0 %v2412
    %v2414 = vpop.f32.mrf.mxu0
    %v2415 = vadd.f32 %v2386, %v2414
    %v2416 = vand.u32 %v2203, 4294901760
    %2417 = vmatmul.f32.gmra.mxu0 %v2416
    %v2418 = vpop.f32.mrf.mxu0
    %v2419 = vadd.f32 %v2390, %v2418
    %2420 = vdwg.mxu0
    %v2421 = vperm.slane %v64, 3
    %v2422 = vadd.f32 %v2415, %v2421
    %v2423 = vadd.f32 %v2419, %v2421
    %2424 = vmatpush.msra.mxu0 0.0
    %2425 = vmatpush.msra.mxu0 0.0
    %2426 = vmatpush.msra.mxu0 0.0
    %2427 = vmatpush.msra.mxu0 0.0
    %2428 = vmatpush.msra.mxu0 0.0
    %2429 = vmatpush.msra.mxu0 0.0
    %2430 = vmatpush.msra.mxu0 0.0
    %2431 = vmatpush.msra.mxu0 0.0
    %2432 = vmatpush.msra.mxu0 0.0
    %2433 = vmatpush.msra.mxu0 0.0
    %2434 = vmatpush.msra.mxu0 0.0
    %2435 = vmatpush.msra.mxu0 0.0
    %v2436 = vand.u32 %v47, 4294901760
    %2437 = vmatpush.msra.mxu0 %v2436
    %v2438 = vand.u32 %v46, 4294901760
    %2439 = vmatpush.msra.mxu0 %v2438
    %v2440 = vand.u32 %v45, 4294901760
    %2441 = vmatpush.msra.mxu0 %v2440
    %v2442 = vand.u32 %v44, 4294901760
    %2443 = vmatpush.msra.mxu0 %v2442
    %v2444 = vand.u32 %v766, 4294901760
    %v2445 = vsub.f32 %v766, %v2444
    %v2446 = vand.u32 %v2445, 4294901760
    %v2447 = vsub.f32 %v2445, %v2446
    %v2448 = vand.u32 %v2447, 4294901760
    %2449 = vmatmul.f32.gmra.mxu0 %v2448
    %v2450 = vpop.f32.mrf.mxu0
    %v2451 = vadd.f32 0.0, %v2450
    %v2452 = vand.u32 %v769, 4294901760
    %v2453 = vsub.f32 %v769, %v2452
    %v2454 = vand.u32 %v2453, 4294901760
    %v2455 = vsub.f32 %v2453, %v2454
    %v2456 = vand.u32 %v2455, 4294901760
    %2457 = vmatmul.f32.gmra.mxu0 %v2456
    %v2458 = vpop.f32.mrf.mxu0
    %v2459 = vadd.f32 0.0, %v2458
    %2460 = vdwg.mxu0
    %2461 = vmatpush.msra.mxu0 0.0
    %2462 = vmatpush.msra.mxu0 0.0
    %2463 = vmatpush.msra.mxu0 0.0
    %2464 = vmatpush.msra.mxu0 0.0
    %2465 = vmatpush.msra.mxu0 0.0
    %2466 = vmatpush.msra.mxu0 0.0
    %2467 = vmatpush.msra.mxu0 0.0
    %2468 = vmatpush.msra.mxu0 0.0
    %2469 = vmatpush.msra.mxu0 0.0
    %2470 = vmatpush.msra.mxu0 0.0
    %2471 = vmatpush.msra.mxu0 0.0
    %2472 = vmatpush.msra.mxu0 0.0
    %v2473 = vand.u32 %v47, 4294901760
    %v2474 = vsub.f32 %v47, %v2473
    %v2475 = vand.u32 %v2474, 4294901760
    %v2476 = vsub.f32 %v2474, %v2475
    %v2477 = vand.u32 %v2476, 4294901760
    %2478 = vmatpush.msra.mxu0 %v2477
    %v2479 = vand.u32 %v46, 4294901760
    %v2480 = vsub.f32 %v46, %v2479
    %v2481 = vand.u32 %v2480, 4294901760
    %v2482 = vsub.f32 %v2480, %v2481
    %v2483 = vand.u32 %v2482, 4294901760
    %2484 = vmatpush.msra.mxu0 %v2483
    %v2485 = vand.u32 %v45, 4294901760
    %v2486 = vsub.f32 %v45, %v2485
    %v2487 = vand.u32 %v2486, 4294901760
    %v2488 = vsub.f32 %v2486, %v2487
    %v2489 = vand.u32 %v2488, 4294901760
    %2490 = vmatpush.msra.mxu0 %v2489
    %v2491 = vand.u32 %v44, 4294901760
    %v2492 = vsub.f32 %v44, %v2491
    %v2493 = vand.u32 %v2492, 4294901760
    %v2494 = vsub.f32 %v2492, %v2493
    %v2495 = vand.u32 %v2494, 4294901760
    %2496 = vmatpush.msra.mxu0 %v2495
    %v2497 = vand.u32 %v766, 4294901760
    %2498 = vmatmul.f32.gmra.mxu0 %v2497
    %v2499 = vpop.f32.mrf.mxu0
    %v2500 = vadd.f32 %v2451, %v2499
    %v2501 = vand.u32 %v769, 4294901760
    %2502 = vmatmul.f32.gmra.mxu0 %v2501
    %v2503 = vpop.f32.mrf.mxu0
    %v2504 = vadd.f32 %v2459, %v2503
    %2505 = vdwg.mxu0
    %2506 = vmatpush.msra.mxu0 0.0
    %2507 = vmatpush.msra.mxu0 0.0
    %2508 = vmatpush.msra.mxu0 0.0
    %2509 = vmatpush.msra.mxu0 0.0
    %2510 = vmatpush.msra.mxu0 0.0
    %2511 = vmatpush.msra.mxu0 0.0
    %2512 = vmatpush.msra.mxu0 0.0
    %2513 = vmatpush.msra.mxu0 0.0
    %2514 = vmatpush.msra.mxu0 0.0
    %2515 = vmatpush.msra.mxu0 0.0
    %2516 = vmatpush.msra.mxu0 0.0
    %2517 = vmatpush.msra.mxu0 0.0
    %v2518 = vand.u32 %v47, 4294901760
    %v2519 = vsub.f32 %v47, %v2518
    %2520 = vmatpush.msra.mxu0 %v2519
    %v2521 = vand.u32 %v46, 4294901760
    %v2522 = vsub.f32 %v46, %v2521
    %2523 = vmatpush.msra.mxu0 %v2522
    %v2524 = vand.u32 %v45, 4294901760
    %v2525 = vsub.f32 %v45, %v2524
    %2526 = vmatpush.msra.mxu0 %v2525
    %v2527 = vand.u32 %v44, 4294901760
    %v2528 = vsub.f32 %v44, %v2527
    %2529 = vmatpush.msra.mxu0 %v2528
    %v2530 = vand.u32 %v766, 4294901760
    %v2531 = vsub.f32 %v766, %v2530
    %2532 = vmatmul.f32.gmra.mxu0 %v2531
    %v2533 = vpop.f32.mrf.mxu0
    %v2534 = vadd.f32 %v2500, %v2533
    %v2535 = vand.u32 %v769, 4294901760
    %v2536 = vsub.f32 %v769, %v2535
    %2537 = vmatmul.f32.gmra.mxu0 %v2536
    %v2538 = vpop.f32.mrf.mxu0
    %v2539 = vadd.f32 %v2504, %v2538
    %2540 = vdwg.mxu0
    %2541 = vmatpush.msra.mxu0 0.0
    %2542 = vmatpush.msra.mxu0 0.0
    %2543 = vmatpush.msra.mxu0 0.0
    %2544 = vmatpush.msra.mxu0 0.0
    %2545 = vmatpush.msra.mxu0 0.0
    %2546 = vmatpush.msra.mxu0 0.0
    %2547 = vmatpush.msra.mxu0 0.0
    %2548 = vmatpush.msra.mxu0 0.0
    %2549 = vmatpush.msra.mxu0 0.0
    %2550 = vmatpush.msra.mxu0 0.0
    %2551 = vmatpush.msra.mxu0 0.0
    %2552 = vmatpush.msra.mxu0 0.0
    %v2553 = vand.u32 %v47, 4294901760
    %2554 = vmatpush.msra.mxu0 %v2553
    %v2555 = vand.u32 %v46, 4294901760
    %2556 = vmatpush.msra.mxu0 %v2555
    %v2557 = vand.u32 %v45, 4294901760
    %2558 = vmatpush.msra.mxu0 %v2557
    %v2559 = vand.u32 %v44, 4294901760
    %2560 = vmatpush.msra.mxu0 %v2559
    %v2561 = vand.u32 %v766, 4294901760
    %v2562 = vsub.f32 %v766, %v2561
    %v2563 = vand.u32 %v2562, 4294901760
    %2564 = vmatmul.f32.gmra.mxu0 %v2563
    %v2565 = vpop.f32.mrf.mxu0
    %v2566 = vadd.f32 %v2534, %v2565
    %v2567 = vand.u32 %v769, 4294901760
    %v2568 = vsub.f32 %v769, %v2567
    %v2569 = vand.u32 %v2568, 4294901760
    %2570 = vmatmul.f32.gmra.mxu0 %v2569
    %v2571 = vpop.f32.mrf.mxu0
    %v2572 = vadd.f32 %v2539, %v2571
    %2573 = vdwg.mxu0
    %2574 = vmatpush.msra.mxu0 0.0
    %2575 = vmatpush.msra.mxu0 0.0
    %2576 = vmatpush.msra.mxu0 0.0
    %2577 = vmatpush.msra.mxu0 0.0
    %2578 = vmatpush.msra.mxu0 0.0
    %2579 = vmatpush.msra.mxu0 0.0
    %2580 = vmatpush.msra.mxu0 0.0
    %2581 = vmatpush.msra.mxu0 0.0
    %2582 = vmatpush.msra.mxu0 0.0
    %2583 = vmatpush.msra.mxu0 0.0
    %2584 = vmatpush.msra.mxu0 0.0
    %2585 = vmatpush.msra.mxu0 0.0
    %v2586 = vand.u32 %v47, 4294901760
    %v2587 = vsub.f32 %v47, %v2586
    %v2588 = vand.u32 %v2587, 4294901760
    %2589 = vmatpush.msra.mxu0 %v2588
    %v2590 = vand.u32 %v46, 4294901760
    %v2591 = vsub.f32 %v46, %v2590
    %v2592 = vand.u32 %v2591, 4294901760
    %2593 = vmatpush.msra.mxu0 %v2592
    %v2594 = vand.u32 %v45, 4294901760
    %v2595 = vsub.f32 %v45, %v2594
    %v2596 = vand.u32 %v2595, 4294901760
    %2597 = vmatpush.msra.mxu0 %v2596
    %v2598 = vand.u32 %v44, 4294901760
    %v2599 = vsub.f32 %v44, %v2598
    %v2600 = vand.u32 %v2599, 4294901760
    %2601 = vmatpush.msra.mxu0 %v2600
    %v2602 = vand.u32 %v766, 4294901760
    %2603 = vmatmul.f32.gmra.mxu0 %v2602
    %v2604 = vpop.f32.mrf.mxu0
    %v2605 = vadd.f32 %v2566, %v2604
    %v2606 = vand.u32 %v769, 4294901760
    %2607 = vmatmul.f32.gmra.mxu0 %v2606
    %v2608 = vpop.f32.mrf.mxu0
    %v2609 = vadd.f32 %v2572, %v2608
    %2610 = vdwg.mxu0
    %2611 = vmatpush.msra.mxu0 0.0
    %2612 = vmatpush.msra.mxu0 0.0
    %2613 = vmatpush.msra.mxu0 0.0
    %2614 = vmatpush.msra.mxu0 0.0
    %2615 = vmatpush.msra.mxu0 0.0
    %2616 = vmatpush.msra.mxu0 0.0
    %2617 = vmatpush.msra.mxu0 0.0
    %2618 = vmatpush.msra.mxu0 0.0
    %2619 = vmatpush.msra.mxu0 0.0
    %2620 = vmatpush.msra.mxu0 0.0
    %2621 = vmatpush.msra.mxu0 0.0
    %2622 = vmatpush.msra.mxu0 0.0
    %v2623 = vand.u32 %v47, 4294901760
    %2624 = vmatpush.msra.mxu0 %v2623
    %v2625 = vand.u32 %v46, 4294901760
    %2626 = vmatpush.msra.mxu0 %v2625
    %v2627 = vand.u32 %v45, 4294901760
    %2628 = vmatpush.msra.mxu0 %v2627
    %v2629 = vand.u32 %v44, 4294901760
    %2630 = vmatpush.msra.mxu0 %v2629
    %v2631 = vand.u32 %v766, 4294901760
    %2632 = vmatmul.f32.gmra.mxu0 %v2631
    %v2633 = vpop.f32.mrf.mxu0
    %v2634 = vadd.f32 %v2605, %v2633
    %v2635 = vand.u32 %v769, 4294901760
    %2636 = vmatmul.f32.gmra.mxu0 %v2635
    %v2637 = vpop.f32.mrf.mxu0
    %v2638 = vadd.f32 %v2609, %v2637
    %2639 = vdwg.mxu0
    %2640 = vmatpush.msra.mxu0 0.0
    %2641 = vmatpush.msra.mxu0 0.0
    %2642 = vmatpush.msra.mxu0 0.0
    %2643 = vmatpush.msra.mxu0 0.0
    %2644 = vmatpush.msra.mxu0 0.0
    %2645 = vmatpush.msra.mxu0 0.0
    %2646 = vmatpush.msra.mxu0 0.0
    %2647 = vmatpush.msra.mxu0 0.0
    %2648 = vmatpush.msra.mxu0 0.0
    %2649 = vmatpush.msra.mxu0 0.0
    %2650 = vmatpush.msra.mxu0 0.0
    %2651 = vmatpush.msra.mxu0 0.0
    %v2652 = vand.u32 %v39, 4294901760
    %2653 = vmatpush.msra.mxu0 %v2652
    %v2654 = vand.u32 %v38, 4294901760
    %2655 = vmatpush.msra.mxu0 %v2654
    %v2656 = vand.u32 %v37, 4294901760
    %2657 = vmatpush.msra.mxu0 %v2656
    %v2658 = vand.u32 %v36, 4294901760
    %2659 = vmatpush.msra.mxu0 %v2658
    %v2660 = vand.u32 %v2200, 4294901760
    %v2661 = vsub.f32 %v2200, %v2660
    %v2662 = vand.u32 %v2661, 4294901760
    %v2663 = vsub.f32 %v2661, %v2662
    %v2664 = vand.u32 %v2663, 4294901760
    %2665 = vmatmul.f32.gmra.mxu0 %v2664
    %v2666 = vpop.f32.mrf.mxu0
    %v2667 = vadd.f32 %v2634, %v2666
    %v2668 = vand.u32 %v2203, 4294901760
    %v2669 = vsub.f32 %v2203, %v2668
    %v2670 = vand.u32 %v2669, 4294901760
    %v2671 = vsub.f32 %v2669, %v2670
    %v2672 = vand.u32 %v2671, 4294901760
    %2673 = vmatmul.f32.gmra.mxu0 %v2672
    %v2674 = vpop.f32.mrf.mxu0
    %v2675 = vadd.f32 %v2638, %v2674
    %2676 = vdwg.mxu0
    %2677 = vmatpush.msra.mxu0 0.0
    %2678 = vmatpush.msra.mxu0 0.0
    %2679 = vmatpush.msra.mxu0 0.0
    %2680 = vmatpush.msra.mxu0 0.0
    %2681 = vmatpush.msra.mxu0 0.0
    %2682 = vmatpush.msra.mxu0 0.0
    %2683 = vmatpush.msra.mxu0 0.0
    %2684 = vmatpush.msra.mxu0 0.0
    %2685 = vmatpush.msra.mxu0 0.0
    %2686 = vmatpush.msra.mxu0 0.0
    %2687 = vmatpush.msra.mxu0 0.0
    %2688 = vmatpush.msra.mxu0 0.0
    %v2689 = vand.u32 %v39, 4294901760
    %v2690 = vsub.f32 %v39, %v2689
    %v2691 = vand.u32 %v2690, 4294901760
    %v2692 = vsub.f32 %v2690, %v2691
    %v2693 = vand.u32 %v2692, 4294901760
    %2694 = vmatpush.msra.mxu0 %v2693
    %v2695 = vand.u32 %v38, 4294901760
    %v2696 = vsub.f32 %v38, %v2695
    %v2697 = vand.u32 %v2696, 4294901760
    %v2698 = vsub.f32 %v2696, %v2697
    %v2699 = vand.u32 %v2698, 4294901760
    %2700 = vmatpush.msra.mxu0 %v2699
    %v2701 = vand.u32 %v37, 4294901760
    %v2702 = vsub.f32 %v37, %v2701
    %v2703 = vand.u32 %v2702, 4294901760
    %v2704 = vsub.f32 %v2702, %v2703
    %v2705 = vand.u32 %v2704, 4294901760
    %2706 = vmatpush.msra.mxu0 %v2705
    %v2707 = vand.u32 %v36, 4294901760
    %v2708 = vsub.f32 %v36, %v2707
    %v2709 = vand.u32 %v2708, 4294901760
    %v2710 = vsub.f32 %v2708, %v2709
    %v2711 = vand.u32 %v2710, 4294901760
    %2712 = vmatpush.msra.mxu0 %v2711
    %v2713 = vand.u32 %v2200, 4294901760
    %2714 = vmatmul.f32.gmra.mxu0 %v2713
    %v2715 = vpop.f32.mrf.mxu0
    %v2716 = vadd.f32 %v2667, %v2715
    %v2717 = vand.u32 %v2203, 4294901760
    %2718 = vmatmul.f32.gmra.mxu0 %v2717
    %v2719 = vpop.f32.mrf.mxu0
    %v2720 = vadd.f32 %v2675, %v2719
    %2721 = vdwg.mxu0
    %2722 = vmatpush.msra.mxu0 0.0
    %2723 = vmatpush.msra.mxu0 0.0
    %2724 = vmatpush.msra.mxu0 0.0
    %2725 = vmatpush.msra.mxu0 0.0
    %2726 = vmatpush.msra.mxu0 0.0
    %2727 = vmatpush.msra.mxu0 0.0
    %2728 = vmatpush.msra.mxu0 0.0
    %2729 = vmatpush.msra.mxu0 0.0
    %2730 = vmatpush.msra.mxu0 0.0
    %2731 = vmatpush.msra.mxu0 0.0
    %2732 = vmatpush.msra.mxu0 0.0
    %2733 = vmatpush.msra.mxu0 0.0
    %v2734 = vand.u32 %v39, 4294901760
    %v2735 = vsub.f32 %v39, %v2734
    %2736 = vmatpush.msra.mxu0 %v2735
    %v2737 = vand.u32 %v38, 4294901760
    %v2738 = vsub.f32 %v38, %v2737
    %2739 = vmatpush.msra.mxu0 %v2738
    %v2740 = vand.u32 %v37, 4294901760
    %v2741 = vsub.f32 %v37, %v2740
    %2742 = vmatpush.msra.mxu0 %v2741
    %v2743 = vand.u32 %v36, 4294901760
    %v2744 = vsub.f32 %v36, %v2743
    %2745 = vmatpush.msra.mxu0 %v2744
    %v2746 = vand.u32 %v2200, 4294901760
    %v2747 = vsub.f32 %v2200, %v2746
    %2748 = vmatmul.f32.gmra.mxu0 %v2747
    %v2749 = vpop.f32.mrf.mxu0
    %v2750 = vadd.f32 %v2716, %v2749
    %v2751 = vand.u32 %v2203, 4294901760
    %v2752 = vsub.f32 %v2203, %v2751
    %2753 = vmatmul.f32.gmra.mxu0 %v2752
    %v2754 = vpop.f32.mrf.mxu0
    %v2755 = vadd.f32 %v2720, %v2754
    %2756 = vdwg.mxu0
    %2757 = vmatpush.msra.mxu0 0.0
    %2758 = vmatpush.msra.mxu0 0.0
    %2759 = vmatpush.msra.mxu0 0.0
    %2760 = vmatpush.msra.mxu0 0.0
    %2761 = vmatpush.msra.mxu0 0.0
    %2762 = vmatpush.msra.mxu0 0.0
    %2763 = vmatpush.msra.mxu0 0.0
    %2764 = vmatpush.msra.mxu0 0.0
    %2765 = vmatpush.msra.mxu0 0.0
    %2766 = vmatpush.msra.mxu0 0.0
    %2767 = vmatpush.msra.mxu0 0.0
    %2768 = vmatpush.msra.mxu0 0.0
    %v2769 = vand.u32 %v39, 4294901760
    %2770 = vmatpush.msra.mxu0 %v2769
    %v2771 = vand.u32 %v38, 4294901760
    %2772 = vmatpush.msra.mxu0 %v2771
    %v2773 = vand.u32 %v37, 4294901760
    %2774 = vmatpush.msra.mxu0 %v2773
    %v2775 = vand.u32 %v36, 4294901760
    %2776 = vmatpush.msra.mxu0 %v2775
    %v2777 = vand.u32 %v2200, 4294901760
    %v2778 = vsub.f32 %v2200, %v2777
    %v2779 = vand.u32 %v2778, 4294901760
    %2780 = vmatmul.f32.gmra.mxu0 %v2779
    %v2781 = vpop.f32.mrf.mxu0
    %v2782 = vadd.f32 %v2750, %v2781
    %v2783 = vand.u32 %v2203, 4294901760
    %v2784 = vsub.f32 %v2203, %v2783
    %v2785 = vand.u32 %v2784, 4294901760
    %2786 = vmatmul.f32.gmra.mxu0 %v2785
    %v2787 = vpop.f32.mrf.mxu0
    %v2788 = vadd.f32 %v2755, %v2787
    %2789 = vdwg.mxu0
    %2790 = vmatpush.msra.mxu0 0.0
    %2791 = vmatpush.msra.mxu0 0.0
    %2792 = vmatpush.msra.mxu0 0.0
    %2793 = vmatpush.msra.mxu0 0.0
    %2794 = vmatpush.msra.mxu0 0.0
    %2795 = vmatpush.msra.mxu0 0.0
    %2796 = vmatpush.msra.mxu0 0.0
    %2797 = vmatpush.msra.mxu0 0.0
    %2798 = vmatpush.msra.mxu0 0.0
    %2799 = vmatpush.msra.mxu0 0.0
    %2800 = vmatpush.msra.mxu0 0.0
    %2801 = vmatpush.msra.mxu0 0.0
    %v2802 = vand.u32 %v39, 4294901760
    %v2803 = vsub.f32 %v39, %v2802
    %v2804 = vand.u32 %v2803, 4294901760
    %2805 = vmatpush.msra.mxu0 %v2804
    %v2806 = vand.u32 %v38, 4294901760
    %v2807 = vsub.f32 %v38, %v2806
    %v2808 = vand.u32 %v2807, 4294901760
    %2809 = vmatpush.msra.mxu0 %v2808
    %v2810 = vand.u32 %v37, 4294901760
    %v2811 = vsub.f32 %v37, %v2810
    %v2812 = vand.u32 %v2811, 4294901760
    %2813 = vmatpush.msra.mxu0 %v2812
    %v2814 = vand.u32 %v36, 4294901760
    %v2815 = vsub.f32 %v36, %v2814
    %v2816 = vand.u32 %v2815, 4294901760
    %2817 = vmatpush.msra.mxu0 %v2816
    %v2818 = vand.u32 %v2200, 4294901760
    %2819 = vmatmul.f32.gmra.mxu0 %v2818
    %v2820 = vpop.f32.mrf.mxu0
    %v2821 = vadd.f32 %v2782, %v2820
    %v2822 = vand.u32 %v2203, 4294901760
    %2823 = vmatmul.f32.gmra.mxu0 %v2822
    %v2824 = vpop.f32.mrf.mxu0
    %v2825 = vadd.f32 %v2788, %v2824
    %2826 = vdwg.mxu0
    %2827 = vmatpush.msra.mxu0 0.0
    %2828 = vmatpush.msra.mxu0 0.0
    %2829 = vmatpush.msra.mxu0 0.0
    %2830 = vmatpush.msra.mxu0 0.0
    %2831 = vmatpush.msra.mxu0 0.0
    %2832 = vmatpush.msra.mxu0 0.0
    %2833 = vmatpush.msra.mxu0 0.0
    %2834 = vmatpush.msra.mxu0 0.0
    %2835 = vmatpush.msra.mxu0 0.0
    %2836 = vmatpush.msra.mxu0 0.0
    %2837 = vmatpush.msra.mxu0 0.0
    %2838 = vmatpush.msra.mxu0 0.0
    %v2839 = vand.u32 %v39, 4294901760
    %2840 = vmatpush.msra.mxu0 %v2839
    %v2841 = vand.u32 %v38, 4294901760
    %2842 = vmatpush.msra.mxu0 %v2841
    %v2843 = vand.u32 %v37, 4294901760
    %2844 = vmatpush.msra.mxu0 %v2843
    %v2845 = vand.u32 %v36, 4294901760
    %2846 = vmatpush.msra.mxu0 %v2845
    %v2847 = vand.u32 %v2200, 4294901760
    %2848 = vmatmul.f32.gmra.mxu0 %v2847
    %v2849 = vpop.f32.mrf.mxu0
    %v2850 = vadd.f32 %v2821, %v2849
    %v2851 = vand.u32 %v2203, 4294901760
    %2852 = vmatmul.f32.gmra.mxu0 %v2851
    %v2853 = vpop.f32.mrf.mxu0
    %v2854 = vadd.f32 %v2825, %v2853
    %2855 = vdwg.mxu0
    %v2856 = vperm.slane %v64, 4
    %v2857 = vadd.f32 %v2850, %v2856
    %v2858 = vadd.f32 %v2854, %v2856
    %v2859 = vxor.u32 %v2857, 2147483648
    %v2860 = vxor.u32 %v2858, 2147483648
    %v2861 = vmul.f32 %v2859, 1.442695
    %v2862 = vpow.pop %v2861
    %v2863 = vmul.f32 %v2860, 1.442695
    %v2864 = vpow.pop %v2863
    %v2865 = vadd.f32 %v2862, 1.0
    %v2866 = vadd.f32 %v2864, 1.0
    %v2867 = vrcp.pop %v2865
    %v2868 = vmul.f32 %v2865, %v2867
    %v2869 = vsub.f32 1.0, %v2868
    %v2870 = vmul.f32 %v2867, %v2869
    %v2871 = vadd.f32 %v2867, %v2870
    %vm2872 = vweird.f32 %v2865
    %vm2873 = vweird.f32 %v2867
    %vm2874 = vmor %vm2872, %vm2873
    %v2875 = vsel %vm2874, %v2867, %v2871
    %v2876 = vand.u32 2147483647, %v2865
    %vm2877 = vcmp.eq.f32.partialorder %v2876, 8.507059e+37
    %v2878 = vand.u32 %v2865, 2147483648
    %v2879 = vor.u32 1.1754944e-38, %v2878
    %v2880 = vsel %vm2877, %v2879, %v2875
    %v2881 = vmul.f32 1.0, %v2880
    %v2882 = vrcp.pop %v2866
    %v2883 = vmul.f32 %v2866, %v2882
    %v2884 = vsub.f32 1.0, %v2883
    %v2885 = vmul.f32 %v2882, %v2884
    %v2886 = vadd.f32 %v2882, %v2885
    %vm2887 = vweird.f32 %v2866
    %vm2888 = vweird.f32 %v2882
    %vm2889 = vmor %vm2887, %vm2888
    %v2890 = vsel %vm2889, %v2882, %v2886
    %v2891 = vand.u32 2147483647, %v2866
    %vm2892 = vcmp.eq.f32.partialorder %v2891, 8.507059e+37
    %v2893 = vand.u32 %v2866, 2147483648
    %v2894 = vor.u32 1.1754944e-38, %v2893
    %v2895 = vsel %vm2892, %v2894, %v2890
    %v2896 = vmul.f32 1.0, %v2895
    %v2897 = vmul.f32 %v2422, %v2881
    %v2898 = vmul.f32 %v2423, %v2896
    %v2899 = vadd.f32 %v67, %v2897
    %v2900 = vadd.f32 %v68, %v2898
    %v2901 = vsel %vm70, %v2899, 0.0
    %2902 = vadd.xlane.f32.xlu0 %v2901
    %v2903 = vpop.xlane.xlu0 %2902
    %v2904 = vsel %vm70, %v2900, 0.0
    %2905 = vadd.xlane.f32.xlu0 %v2904
    %v2906 = vpop.xlane.xlu0 %2905
    %v2907 = vrcp.pop 32.0
    %v2908 = vmul.f32 32.0, %v2907
    %v2909 = vsub.f32 1.0, %v2908
    %v2910 = vmul.f32 %v2907, %v2909
    %v2911 = vadd.f32 %v2907, %v2910
    %vm2912 = vweird.f32 %v2907
    %v2913 = vsel %vm2912, %v2907, %v2911
    %v2914 = vmul.f32 %v2903, %v2913
    %v2915 = vmul.f32 %v2906, %v2913
    %v2916 = vsub.f32 %v2899, %v2914
    %v2917 = vsub.f32 %v2900, %v2915
    %v2918 = vmul.f32 %v2916, %v2916
    %v2919 = vmul.f32 %v2917, %v2917
    %v2920 = vsel %vm70, %v2918, 0.0
    %2921 = vadd.xlane.f32.xlu0 %v2920
    %v2922 = vpop.xlane.xlu0 %2921
    %v2923 = vsel %vm70, %v2919, 0.0
    %2924 = vadd.xlane.f32.xlu0 %v2923
    %v2925 = vpop.xlane.xlu0 %2924
    %v2926 = vmul.f32 %v2922, %v2913
    %v2927 = vmul.f32 %v2925, %v2913
    %v2928 = vadd.f32 %v2926, 1e-05
    %v2929 = vadd.f32 %v2927, 1e-05
    %v2930 = vrsqrt.pop %v2928
    %v2931 = vmul.f32 %v2930, %v2928
    %v2932 = vmul.f32 %v2931, %v2930
    %v2933 = vmul.f32 0.5, %v2932
    %v2934 = vsub.f32 1.5, %v2933
    %v2935 = vmul.f32 %v2930, %v2934
    %vm2936 = vweird.f32 %v2928
    %vm2937 = vweird.f32 %v2930
    %vm2938 = vmor %vm2936, %vm2937
    %v2939 = vsel %vm2938, %v2930, %v2935
    %v2940 = vrsqrt.pop %v2929
    %v2941 = vmul.f32 %v2940, %v2929
    %v2942 = vmul.f32 %v2941, %v2940
    %v2943 = vmul.f32 0.5, %v2942
    %v2944 = vsub.f32 1.5, %v2943
    %v2945 = vmul.f32 %v2940, %v2944
    %vm2946 = vweird.f32 %v2929
    %vm2947 = vweird.f32 %v2940
    %vm2948 = vmor %vm2946, %vm2947
    %v2949 = vsel %vm2948, %v2940, %v2945
    %v2950 = vmul.f32 %v2916, %v2939
    %v2951 = vmul.f32 %v2917, %v2949
    %2952 = vst.msk [vmem:[#allocation2] sm:$0xff] %vm70, %v2950
    %2953 = vst.msk [vmem:[#allocation2 + $0x8] sm:$0xff] %vm70, %v2951
    // Predicated region
    $region18: #{refining_block.1} parent=1 // pred_check
      _
    $region19: #{refining_block.1} parent=1 // pred_check_branch
      %2955 = sbr.rel (0) target = $region21
    $region20: #{refining_block.1} parent=1 // pred_region
      %2957 = vsyncadd [#allocation3], 0
      %s2958 = sshll.u32 [#allocation2], 4
      %s2959 = int_to_ptr.vmem [resolvable:$true] %s2958
      %s2960 = sshll.u32 %s4, 4
      %s2961 = int_to_ptr.hbm [resolvable:$true] %s2960
      %2966 = dma.vmem_to_hbm [thread:$0]  %s2959, 256, %s2961, [#allocation3], 128, 128, 8
    $region21: #{refining_block.1} parent=1 // pred_fallthru
      _
    // Predicated region
    $region22: #{refining_block.1} parent=1 // pred_check
      _
    $region23: #{refining_block.1} parent=1 // pred_check_branch
      %2968 = sbr.rel (0) target = $region25
    $region24: #{refining_block.1} parent=1 // pred_region
      %2970 = dma.done [#allocation3], 256
    $region25: #{refining_block.1} parent=1 // pred_fallthru
      _
    %2971 = vsyncpa [#allocation3], 1

</llo_original>
